<compile_context>
chip_gen: v5e
topology: v5e:2x2
jax: 0.10.0
libtpu: 0.0.40
codegen_flags: <defaults>
</compile_context>

<pallas_src>
import functools
import math

import jax
import jax.numpy as jnp
from jax.experimental import pallas as pl
from jax.experimental.pallas import tpu as pltpu


# ---------------------------------------------------------------------------
# Single-buffering support probe for resident-weight BlockSpecs.
# ---------------------------------------------------------------------------
_SINGLE_BUFFER_WEIGHTS = [None]          # None = unknown, True/False after probe


def _probe_single_buffering():
    """Check once whether pipeline_mode=pl.Buffered(1) is supported."""
    if _SINGLE_BUFFER_WEIGHTS[0] is not None:
        return

    def _k(x_ref, w_ref, o_ref):
        o_ref[...] = x_ref[...] + w_ref[...]

    try:
        x = jnp.ones((16, 128), jnp.float32)
        w = jnp.full((8, 128), 2.0, jnp.float32)
        out = pl.pallas_call(
            _k,
            out_shape=jax.ShapeDtypeStruct((16, 128), jnp.float32),
            grid_spec=pltpu.PrefetchScalarGridSpec(
                num_scalar_prefetch=0,
                grid=(2,),
                in_specs=[
                    pl.BlockSpec((8, 128), lambda i: (i, 0)),
                    pl.BlockSpec((8, 128), lambda i: (0, 0),
                                 pipeline_mode=pl.Buffered(1)),
                ],
                out_specs=pl.BlockSpec((8, 128), lambda i: (i, 0)),
            ),
        )(x, w)
        ok = bool(jnp.all(out == 3.0))
    except Exception:
        ok = False
    _SINGLE_BUFFER_WEIGHTS[0] = ok


def _resident_spec(block_shape, index_map):
    """BlockSpec for operands whose block index never changes (weights).

    Single buffering halves their VMEM footprint; falls back to the default
    double buffering when unsupported."""
    if _SINGLE_BUFFER_WEIGHTS[0]:
        return pl.BlockSpec(block_shape, index_map, pipeline_mode=pl.Buffered(1))
    return pl.BlockSpec(block_shape, index_map)


def _vmem_limit(nbytes):
    """Actual footprint + headroom, clamped so it is valid on v5e/v6e/v7x."""
    return int(min(max(int(nbytes * 1.5), 32 * 1024 * 1024), 64 * 1024 * 1024))


def _row_tile(rows, target=512):
    """Row tile: multiple of 128 when possible, >= 2 grid steps when rows allow."""
    if rows >= 256:
        return max(128, min(target, (rows // 2) // 128 * 128))
    if rows >= 16:
        return max(8, (rows // 2) // 8 * 8)
    return rows


def _choose_attn_block(N, target=128):
    for blk in sorted({b for b in (target, 512, 256, 128, 64, 32, 16, 8)
                       if b % 8 == 0}, reverse=True):
        if blk <= min(target, N) and N % blk == 0:
            return blk
    return N


def _build_kv_schedule(N, blk, window):
    """Static per-query-block list of key/value blocks to visit.

    Block 0 holds the single global token, so every query block visits it; the
    global query row lives in query block 0, which therefore visits every key
    block.  Rows are padded by repeating their last entry: repeated indices are
    not re-DMA'd and their compute is skipped via `count`."""
    nkb = N // blk
    rows, counts = [], []
    for qi in range(nkb):
        if qi == 0:
            blocks = list(range(nkb))
        else:
            lo = max(0, (qi * blk - window) // blk)
            hi = min(nkb - 1, ((qi + 1) * blk - 1 + window) // blk)
            blocks = sorted({0, *range(lo, hi + 1)})
        rows.append(blocks)
        counts.append(len(blocks))
    ns = max(counts)
    rows = [r + [r[-1]] * (ns - len(r)) for r in rows]
    return (jnp.asarray(rows, jnp.int32), jnp.asarray(counts, jnp.int32),
            sum(counts))


# ---------------------------------------------------------------------------
# Kernel 1: LayerNorm + fused QKV projection (row tiled, "parallel")
# ---------------------------------------------------------------------------
def _ln_qkv_kernel(x_ref, g_ref, beta_ref, wq_ref, bq_ref, wk_ref, bk_ref,
                   wv_ref, bv_ref, q_ref, k_ref, v_ref, *, eps):
    x = x_ref[...].astype(jnp.float32)                        # [TM, D]
    mu = jnp.mean(x, axis=-1, keepdims=True)
    var = jnp.mean(jnp.square(x - mu), axis=-1, keepdims=True)
    xn = (x - mu) * jax.lax.rsqrt(var + eps)
    xn = (xn * g_ref[...] + beta_ref[...]).astype(jnp.bfloat16)
    q_ref[...] = (jnp.dot(xn, wq_ref[...], preferred_element_type=jnp.float32)
                  + bq_ref[...]).astype(q_ref.dtype)
    k_ref[...] = (jnp.dot(xn, wk_ref[...], preferred_element_type=jnp.float32)
                  + bk_ref[...]).astype(k_ref.dtype)
    v_ref[...] = (jnp.dot(xn, wv_ref[...], preferred_element_type=jnp.float32)
                  + bv_ref[...]).astype(v_ref.dtype)


def ln_qkv_projection(x2, p, *, eps=1e-5, block_rows=512):
    """x2: [T, D] f32.  Returns (q, k, v), each [T, inner] bf16."""
    T, D = x2.shape
    inner = p["wq"].shape[1]
    tm = _row_tile(T, block_rows)
    out_sd = jax.ShapeDtypeStruct((T, inner), jnp.bfloat16)
    footprint = (3 * D * inner * 2 + (3 * inner + 2 * D) * 4
                 + 2 * tm * D * 4 + 3 * 2 * tm * inner * 2)
    cost = pl.CostEstimate(
        flops=int(3 * 2 * T * D * inner),
        transcendentals=0,
        bytes_accessed=int(4 * T * D + 3 * 2 * T * inner + 3 * 2 * D * inner),
    )
    return pl.pallas_call(
        functools.partial(_ln_qkv_kernel, eps=eps),
        out_shape=(out_sd, out_sd, out_sd),
        grid_spec=pltpu.PrefetchScalarGridSpec(
            num_scalar_prefetch=0,
            grid=(pl.cdiv(T, tm),),
            in_specs=[
                pl.BlockSpec((tm, D), lambda i: (i, 0)),       # x tile (pipelined)
                _resident_spec((1, D), lambda i: (0, 0)),      # LN gamma
                _resident_spec((1, D), lambda i: (0, 0)),      # LN beta
                _resident_spec((D, inner), lambda i: (0, 0)),  # Wq (bf16, resident)
                _resident_spec((1, inner), lambda i: (0, 0)),  # bq
                _resident_spec((D, inner), lambda i: (0, 0)),  # Wk
                _resident_spec((1, inner), lambda i: (0, 0)),  # bk
                _resident_spec((D, inner), lambda i: (0, 0)),  # Wv
                _resident_spec((1, inner), lambda i: (0, 0)),  # bv
            ],
            out_specs=(
                pl.BlockSpec((tm, inner), lambda i: (i, 0)),
                pl.BlockSpec((tm, inner), lambda i: (i, 0)),
                pl.BlockSpec((tm, inner), lambda i: (i, 0)),
            ),
        ),
        compiler_params=pltpu.CompilerParams(
            dimension_semantics=("parallel",),
            vmem_limit_bytes=_vmem_limit(footprint),
        ),
        cost_estimate=cost,
    )(x2, p["ln_g"], p["ln_b"], p["wq"], p["bq"], p["wk"], p["bk"],
      p["wv"], p["bv"])


# ---------------------------------------------------------------------------
# Kernel 2: banded (sliding window + global token 0) attention, flash style,
#           fused output projection + residual.
# ---------------------------------------------------------------------------
def _banded_attn_kernel(kvidx_ref, count_ref,                      # scalar prefetch
                        q_ref, k_ref, v_ref, x_ref, wo_ref, bo_ref,  # inputs
                        o_ref,                                      # output
                        m_sc, l_sc, acc_sc, o_sc,                   # scratch
                        *, heads, dim_head, blk, window, n_valid, scale):
    qi = pl.program_id(1)
    s = pl.program_id(2)

    @pl.when(s == 0)
    def _():
        m_sc[...] = jnp.full_like(m_sc, -jnp.inf)
        l_sc[...] = jnp.zeros_like(l_sc)
        acc_sc[...] = jnp.zeros_like(acc_sc)

    kblk = kvidx_ref[qi, s]                       # actual key block this step

    @pl.when(s < count_ref[qi])                   # skip padded (repeat) steps
    def _():
        q = q_ref[0]                              # [H, blk, dh] bf16
        k = k_ref[0]
        v = v_ref[0]
        sc = jnp.einsum("hqd,hkd->hqk", q, k,
                        preferred_element_type=jnp.float32) * scale
        # In-kernel band + global-token-0 + padding mask (no N x N bias array).
        q_pos = qi * blk + jax.lax.broadcasted_iota(jnp.int32, (blk, blk), 0)
        k_pos = kblk * blk + jax.lax.broadcasted_iota(jnp.int32, (blk, blk), 1)
        allowed = ((jnp.abs(q_pos - k_pos) <= window)
                   | (q_pos == 0) | (k_pos == 0)) & (k_pos < n_valid)
        sc = sc + jnp.where(allowed, 0.0, -1e9)[None, :, :]
        # Online softmax update.
        m_prev = m_sc[...]
        m_new = jnp.maximum(m_prev, jnp.max(sc, axis=-1, keepdims=True))
        alpha = jnp.exp(m_prev - m_new)
        p = jnp.exp(sc - m_new)
        l_sc[...] = alpha * l_sc[...] + jnp.sum(p, axis=-1, keepdims=True)
        acc_sc[...] = alpha * acc_sc[...] + jnp.einsum(
            "hqk,hkd->hqd", p.astype(jnp.bfloat16), v,
            preferred_element_type=jnp.float32)
        m_sc[...] = m_new

    @pl.when(s == pl.num_programs(2) - 1)
    def _():
        inv_l = pl.reciprocal(l_sc[...], approx=True)           # [H, blk, 1]
        # Stage all heads into a lane-dense [blk, inner] buffer, then one fused
        # [blk, inner] @ [inner, D] output projection on the MXU.
        for h in range(heads):                                  # small static unroll
            o_sc[:, h * dim_head:(h + 1) * dim_head] = acc_sc[h] * inv_l[h]
        y = jnp.dot(o_sc[...].astype(jnp.bfloat16), wo_ref[...],
                    preferred_element_type=jnp.float32) + bo_ref[...]
        o_ref[0] = (y + x_ref[0].astype(jnp.float32)).astype(o_ref.dtype)


def banded_attention_residual(x, q, k, v, p, kvidx, count, *, heads, dim_head,
                              blk, window, n_valid, total_steps):
    """x: [B, N, D] f32; q/k/v: [B, heads, N, dh] bf16 (head-major)."""
    B, N, D = x.shape
    inner = heads * dim_head
    nqb = N // blk
    ns = kvidx.shape[1]
    scale = 1.0 / math.sqrt(dim_head)

    kernel = functools.partial(
        _banded_attn_kernel, heads=heads, dim_head=dim_head, blk=blk,
        window=window, n_valid=n_valid, scale=scale)

    footprint = (3 * 2 * heads * blk * max(dim_head, 128) * 2   # q/k/v blocks (2 bufs)
                 + 2 * 2 * blk * D * 4                          # x + out blocks
                 + inner * D * 2 + D * 4                        # Wo + bo
                 + heads * blk * (dim_head + 2 * 128) * 4       # acc/m/l scratch
                 + blk * inner * 4)                             # staging buffer
    cost = pl.CostEstimate(
        flops=int(B * (4 * heads * dim_head * blk * blk * total_steps
                       + 2 * N * inner * D)),
        transcendentals=int(B * heads * blk * blk * total_steps),
        bytes_accessed=int(B * (3 * 2 * N * inner + 2 * 4 * N * D)
                           + 2 * inner * D + 4 * D),
    )
    return pl.pallas_call(
        kernel,
        out_shape=jax.ShapeDtypeStruct((B, N, D), x.dtype),
        grid_spec=pltpu.PrefetchScalarGridSpec(
            num_scalar_prefetch=2,                     # kv-block schedule + counts
            grid=(B, nqb, ns),
            in_specs=[
                pl.BlockSpec((1, heads, blk, dim_head),
                             lambda b, i, s, kv, cnt: (b, 0, i, 0)),          # q
                pl.BlockSpec((1, heads, blk, dim_head),
                             lambda b, i, s, kv, cnt: (b, 0, kv[i, s], 0)),   # k
                pl.BlockSpec((1, heads, blk, dim_head),
                             lambda b, i, s, kv, cnt: (b, 0, kv[i, s], 0)),   # v
                pl.BlockSpec((1, blk, D),
                             lambda b, i, s, kv, cnt: (b, i, 0)),             # x (residual)
                _resident_spec((inner, D), lambda b, i, s, kv, cnt: (0, 0)),  # Wo
                _resident_spec((1, D), lambda b, i, s, kv, cnt: (0, 0)),      # bo
            ],
            out_specs=pl.BlockSpec((1, blk, D),
                                   lambda b, i, s, kv, cnt: (b, i, 0)),
            scratch_shapes=[
                pltpu.VMEM((heads, blk, 1), jnp.float32),        # running max
                pltpu.VMEM((heads, blk, 1), jnp.float32),        # running sum
                pltpu.VMEM((heads, blk, dim_head), jnp.float32),  # accumulator
                pltpu.VMEM((blk, inner), jnp.float32),           # head staging
            ],
        ),
        compiler_params=pltpu.CompilerParams(
            dimension_semantics=("parallel", "parallel", "arbitrary"),
            vmem_limit_bytes=_vmem_limit(footprint),
        ),
        cost_estimate=cost,
    )(kvidx, count, q, k, v, x, p["wo"], p["bo"])


# ---------------------------------------------------------------------------
# Kernel 3: fused Residual(PreNorm(FeedForward))
# ---------------------------------------------------------------------------
def _ffn_kernel(x_ref, g_ref, beta_ref, w1_ref, b1_ref, w2_ref, b2_ref, o_ref,
                *, eps):
    x = x_ref[...].astype(jnp.float32)                        # [TM, D]
    mu = jnp.mean(x, axis=-1, keepdims=True)
    var = jnp.mean(jnp.square(x - mu), axis=-1, keepdims=True)
    xn = (x - mu) * jax.lax.rsqrt(var + eps)
    xn = xn * g_ref[...] + beta_ref[...]
    h = jnp.dot(xn.astype(jnp.bfloat16), w1_ref[...],
                preferred_element_type=jnp.float32) + b1_ref[...]
    h = jax.nn.gelu(h, approximate=True)
    y = jnp.dot(h.astype(jnp.bfloat16), w2_ref[...],
                preferred_element_type=jnp.float32) + b2_ref[...]
    o_ref[...] = (y + x).astype(o_ref.dtype)


def residual_prenorm_ffn(x2, p, *, block_rows=512, eps=1e-5):
    """x2: [T, D] flattened tokens.  Returns x2 + FFN(LN(x2))."""
    T, D = x2.shape
    H = p["w1"].shape[1]
    tm = _row_tile(T, block_rows)
    footprint = (2 * D * H * 2 + (H + 3 * D) * 4
                 + 2 * 2 * tm * D * 4 + tm * H * 4)
    cost = pl.CostEstimate(
        flops=int(2 * 2 * T * D * H),
        transcendentals=int(T * H),
        bytes_accessed=int(4 * 2 * T * D + 2 * 2 * D * H + 4 * (2 * D + H)),
    )
    return pl.pallas_call(
        functools.partial(_ffn_kernel, eps=eps),
        out_shape=jax.ShapeDtypeStruct((T, D), x2.dtype),
        grid_spec=pltpu.PrefetchScalarGridSpec(
            num_scalar_prefetch=0,
            grid=(pl.cdiv(T, tm),),
            in_specs=[
                pl.BlockSpec((tm, D), lambda i: (i, 0)),       # x tile (pipelined)
                _resident_spec((1, D), lambda i: (0, 0)),      # LN gamma
                _resident_spec((1, D), lambda i: (0, 0)),      # LN beta
                _resident_spec((D, H), lambda i: (0, 0)),      # W1 (bf16, resident)
                _resident_spec((1, H), lambda i: (0, 0)),      # b1
                _resident_spec((H, D), lambda i: (0, 0)),      # W2 (bf16, resident)
                _resident_spec((1, D), lambda i: (0, 0)),      # b2
            ],
            out_specs=pl.BlockSpec((tm, D), lambda i: (i, 0)),
        ),
        compiler_params=pltpu.CompilerParams(
            dimension_semantics=("parallel",),
            vmem_limit_bytes=_vmem_limit(footprint),
        ),
        cost_estimate=cost,
    )(x2, p["ln_g"], p["ln_b"], p["w1"], p["b1"], p["w2"], p["b2"])


# ---------------------------------------------------------------------------
# Longformer forward (pad to window size, layer stack, truncate)
# ---------------------------------------------------------------------------
def longformer_forward(x, params, *, heads, dim_head, attention_window,
                       attention_mode="sliding_chunks", q_block=128):
    _probe_single_buffering()
    B, n, D = x.shape
    inner = heads * dim_head
    w_eff = attention_window * 2 if attention_mode == "sliding_chunks" \
        else attention_window
    pad = (-n) % w_eff
    N = n + pad
    x = jnp.pad(x, ((0, 0), (0, pad), (0, 0)))

    blk = _choose_attn_block(N, q_block)
    kvidx, count, total_steps = _build_kv_schedule(N, blk, attention_window)

    for layer in params["layers"]:
        a = layer["attn"]
        q2, k2, v2 = ln_qkv_projection(x.reshape(B * N, D), a)
        # Head-major layout once, outside the kernel (no per-head lane slicing
        # inside the attention loop).
        def to_heads(t):
            return t.reshape(B, N, heads, dim_head).transpose(0, 2, 1, 3)
        x = banded_attention_residual(
            x, to_heads(q2), to_heads(k2), to_heads(v2), a, kvidx, count,
            heads=heads, dim_head=dim_head, blk=blk, window=attention_window,
            n_valid=n, total_steps=total_steps)
        x = residual_prenorm_ffn(x.reshape(B * N, D),
                                 layer["ffn"]).reshape(B, N, D)
    return x[:, :n]


# ---------------------------------------------------------------------------
# Pure-JAX reference (f32, dense masked attention) mirroring the same math
# ---------------------------------------------------------------------------
def build_longformer_bias(mask, window):
    """mask: [B, N] with 0 = padding, 1 = local token, 2 = global token."""
    B, N = mask.shape
    i = jnp.arange(N)[:, None]
    j = jnp.arange(N)[None, :]
    local = jnp.abs(i - j) <= window
    key_ok = (mask > 0)[:, None, :]
    q_global = (mask == 2)[:, :, None]
    k_global = (mask == 2)[:, None, :]
    allowed = (local[None, :, :] | q_global | k_global) & key_ok
    return jnp.where(allowed, 0.0, -1e9).astype(jnp.float32)


def _layernorm_ref(x, g, b, eps=1e-5):
    mu = jnp.mean(x, axis=-1, keepdims=True)
    var = jnp.mean(jnp.square(x - mu), axis=-1, keepdims=True)
    return (x - mu) * jax.lax.rsqrt(var + eps) * g + b


def longformer_reference(x, params, *, heads, dim_head, attention_window,
                         attention_mode="sliding_chunks"):
    B, n, D = x.shape
    w_eff = attention_window * 2 if attention_mode == "sliding_chunks" \
        else attention_window
    pad = (-n) % w_eff
    mask = jnp.ones((B, n), jnp.float32).at[:, 0].set(2.0)
    x = jnp.pad(x, ((0, 0), (0, pad), (0, 0)))
    mask = jnp.pad(mask, ((0, 0), (0, pad)))
    N = n + pad
    bias = build_longformer_bias(mask, attention_window)
    scale = 1.0 / math.sqrt(dim_head)
    for layer in params["layers"]:
        a = layer["attn"]
        xn = _layernorm_ref(x, a["ln_g"][0], a["ln_b"][0])
        q = (xn @ a["wq"] + a["bq"][0]).reshape(B, N, heads, dim_head)
        k = (xn @ a["wk"] + a["bk"][0]).reshape(B, N, heads, dim_head)
        v = (xn @ a["wv"] + a["bv"][0]).reshape(B, N, heads, dim_head)
        s = jnp.einsum("bnhd,bmhd->bhnm", q, k) * scale + bias[:, None, :, :]
        p = jax.nn.softmax(s, axis=-1)
        o = jnp.einsum("bhnm,bmhd->bnhd", p, v).reshape(B, N, heads * dim_head)
        x = x + o @ a["wo"] + a["bo"][0]
        f = layer["ffn"]
        xn = _layernorm_ref(x, f["ln_g"][0], f["ln_b"][0])
        h = jax.nn.gelu(xn @ f["w1"] + f["b1"][0], approximate=True)
        x = x + h @ f["w2"] + f["b2"][0]
    return x[:, :n]


# ---------------------------------------------------------------------------
# Deterministic parameter init (+ host-side bf16 weight cast for the kernels)
# ---------------------------------------------------------------------------
def init_params(key, *, dim, depth, heads, dim_head, mlp_dim):
    inner = heads * dim_head
    layers = []
    for _ in range(depth):
        key, *ks = jax.random.split(key, 9)
        attn = dict(
            ln_g=jnp.ones((1, dim), jnp.float32),
            ln_b=jnp.zeros((1, dim), jnp.float32),
            wq=jax.random.normal(ks[0], (dim, inner), jnp.float32) * 0.05,
            bq=jax.random.normal(ks[1], (1, inner), jnp.float32) * 0.02,
            wk=jax.random.normal(ks[2], (dim, inner), jnp.float32) * 0.05,
            bk=jax.random.normal(ks[3], (1, inner), jnp.float32) * 0.02,
            wv=jax.random.normal(ks[4], (dim, inner), jnp.float32) * 0.05,
            bv=jax.random.normal(ks[5], (1, inner), jnp.float32) * 0.02,
            wo=jax.random.normal(ks[6], (inner, dim), jnp.float32) * 0.05,
            bo=jax.random.normal(ks[7], (1, dim), jnp.float32) * 0.02,
        )
        key, k1, k2, k3, k4 = jax.random.split(key, 5)
        ffn = dict(
            ln_g=jnp.ones((1, dim), jnp.float32),
            ln_b=jnp.zeros((1, dim), jnp.float32),
            w1=jax.random.normal(k1, (dim, mlp_dim), jnp.float32) * 0.05,
            b1=jax.random.normal(k2, (1, mlp_dim), jnp.float32) * 0.02,
            w2=jax.random.normal(k3, (mlp_dim, dim), jnp.float32) * 0.05,
            b2=jax.random.normal(k4, (1, dim), jnp.float32) * 0.02,
        )
        layers.append(dict(attn=attn, ffn=ffn))
    return dict(layers=layers)


def prepare_kernel_params(params):
    """Pre-cast matmul weights to bf16 on the host (halves weight DMA/VMEM)."""
    layers = []
    for layer in params["layers"]:
        a, f = dict(layer["attn"]), dict(layer["ffn"])
        for k in ("wq", "wk", "wv", "wo"):
            a[k] = a[k].astype(jnp.bfloat16)
        for k in ("w1", "w2"):
            f[k] = f[k].astype(jnp.bfloat16)
        layers.append(dict(attn=a, ffn=f))
    return dict(layers=layers)


if __name__ == "__main__":
    key = jax.random.PRNGKey(0)
    # Small, lane-dense shapes (D and inner multiples of 128).
    dim, depth, heads, dim_head, mlp_dim = 128, 2, 4, 32, 256
    attention_window = 4                  # sliding_chunks -> pad to 2*w = 8
    batch, seq = 2, 27                    # pads to N=32; q_block=8 -> 4x4 blocks

    kx, kp = jax.random.split(key)
    x = jax.random.normal(kx, (batch, seq, dim), dtype=jnp.float32)
    params = init_params(kp, dim=dim, depth=depth, heads=heads,
                         dim_head=dim_head, mlp_dim=mlp_dim)
    kparams = prepare_kernel_params(params)

    out = longformer_forward(x, kparams, heads=heads, dim_head=dim_head,
                             attention_window=attention_window, q_block=8)
    jax.block_until_ready(out)

    ref = longformer_reference(x, params, heads=heads, dim_head=dim_head,
                               attention_window=attention_window)
    assert out.shape == (batch, seq, dim) and out.dtype == x.dtype
    max_err = float(jnp.max(jnp.abs(out - ref)))
    # bf16 weights/activations on the MXU + approx reciprocal vs f32 reference.
    assert jnp.allclose(out, ref, atol=5e-2, rtol=5e-2), f"max abs err {max_err}"

    print("KERNEL_OK")
</pallas_src>

<mosaic_0001>
module attributes {stable_mosaic.version = 11 : i64} {
  func.func @_k(%arg0: i32, %arg1: memref<8x128xf32, #tpu.memory_space<vmem>>, %arg2: memref<8x128xf32, #tpu.memory_space<vmem>>, %arg3: memref<8x128xf32, #tpu.memory_space<vmem>>) attributes {dimension_semantics = [#tpu.dimension_semantics<arbitrary>], iteration_bounds = array<i64: 2>, scalar_prefetch = 0 : i64, scratch_operands = 0 : i64, tpu.core_type = #tpu.core_type<tc>, window_params = [{transform_indices = @transform_0, window_bounds = array<i64: 8, 128>}, {pipeline_mode = #tpu.pipeline_mode<synchronous>, transform_indices = @transform_1, window_bounds = array<i64: 8, 128>}, {transform_indices = @transform_2, window_bounds = array<i64: 8, 128>}]} {
    %c0 = arith.constant 0 : index
    %c0_0 = arith.constant 0 : index
    %0 = vector.load %arg1[%c0, %c0_0] : memref<8x128xf32, #tpu.memory_space<vmem>>, vector<8x128xf32>
    %c0_1 = arith.constant 0 : index
    %c0_2 = arith.constant 0 : index
    %1 = vector.load %arg2[%c0_1, %c0_2] : memref<8x128xf32, #tpu.memory_space<vmem>>, vector<8x128xf32>
    %2 = arith.addf %0, %1 : vector<8x128xf32>
    %c0_3 = arith.constant 0 : index
    %c0_4 = arith.constant 0 : index
    %3 = vector.load %arg3[%c0_3, %c0_4] : memref<8x128xf32, #tpu.memory_space<vmem>>, vector<8x128xf32>
    tpu.vector_store %arg3[%c0_3, %c0_4], %2 {strides = array<i32>} : memref<8x128xf32, #tpu.memory_space<vmem>>, vector<8x128xf32>,
    return
  }
  func.func @transform_0(%arg0: i32) -> (i32, i32) {
    %c0_i32 = arith.constant 0 : i32
    %c0_i32_0 = arith.constant 0 : i32
    return %arg0, %c0_i32 : i32, i32
  }
  func.func @transform_1(%arg0: i32) -> (i32, i32) {
    %c0_i32 = arith.constant 0 : i32
    %c0_i32_0 = arith.constant 0 : i32
    %c0_i32_1 = arith.constant 0 : i32
    return %c0_i32, %c0_i32_0 : i32, i32
  }
  func.func @transform_2(%arg0: i32) -> (i32, i32) {
    %c0_i32 = arith.constant 0 : i32
    %c0_i32_0 = arith.constant 0 : i32
    return %arg0, %c0_i32 : i32, i32
  }
}

module attributes {stable_mosaic.version = 11 : i64} {
  func.func @_ln_qkv_kernel(%arg0: i32, %arg1: memref<32x128xf32, #tpu.memory_space<vmem>>, %arg2: memref<1x128xf32, #tpu.memory_space<vmem>>, %arg3: memref<1x128xf32, #tpu.memory_space<vmem>>, %arg4: memref<128x128xbf16, #tpu.memory_space<vmem>>, %arg5: memref<1x128xf32, #tpu.memory_space<vmem>>, %arg6: memref<128x128xbf16, #tpu.memory_space<vmem>>, %arg7: memref<1x128xf32, #tpu.memory_space<vmem>>, %arg8: memref<128x128xbf16, #tpu.memory_space<vmem>>, %arg9: memref<1x128xf32, #tpu.memory_space<vmem>>, %arg10: memref<32x128xbf16, #tpu.memory_space<vmem>>, %arg11: memref<32x128xbf16, #tpu.memory_space<vmem>>, %arg12: memref<32x128xbf16, #tpu.memory_space<vmem>>) attributes {dimension_semantics = [#tpu.dimension_semantics<parallel>], iteration_bounds = array<i64: 2>, scalar_prefetch = 0 : i64, scratch_operands = 0 : i64, tpu.core_type = #tpu.core_type<tc>, window_params = [{transform_indices = @transform_0, window_bounds = array<i64: 32, 128>}, {pipeline_mode = #tpu.pipeline_mode<synchronous>, transform_indices = @transform_1, window_bounds = array<i64: 1, 128>}, {pipeline_mode = #tpu.pipeline_mode<synchronous>, transform_indices = @transform_2, window_bounds = array<i64: 1, 128>}, {pipeline_mode = #tpu.pipeline_mode<synchronous>, transform_indices = @transform_3, window_bounds = array<i64: 128, 128>}, {pipeline_mode = #tpu.pipeline_mode<synchronous>, transform_indices = @transform_4, window_bounds = array<i64: 1, 128>}, {pipeline_mode = #tpu.pipeline_mode<synchronous>, transform_indices = @transform_5, window_bounds = array<i64: 128, 128>}, {pipeline_mode = #tpu.pipeline_mode<synchronous>, transform_indices = @transform_6, window_bounds = array<i64: 1, 128>}, {pipeline_mode = #tpu.pipeline_mode<synchronous>, transform_indices = @transform_7, window_bounds = array<i64: 128, 128>}, {pipeline_mode = #tpu.pipeline_mode<synchronous>, transform_indices = @transform_8, window_bounds = array<i64: 1, 128>}, {transform_indices = @transform_9, window_bounds = array<i64: 32, 128>}, {transform_indices = @transform_10, window_bounds = array<i64: 32, 128>}, {transform_indices = @transform_11, window_bounds = array<i64: 32, 128>}]} {
    %c0 = arith.constant 0 : index
    %c0_0 = arith.constant 0 : index
    %0 = vector.load %arg1[%c0, %c0_0] : memref<32x128xf32, #tpu.memory_space<vmem>>, vector<32x128xf32>
    %cst = arith.constant dense<0.000000e+00> : vector<32xf32>
    %1 = vector.multi_reduction <add>, %0, %cst [1] : vector<32x128xf32> to vector<32xf32>
    %2 = vector.shape_cast %1 : vector<32xf32> to vector<32x1xf32>
    %cst_1 = arith.constant 1.280000e+02 : f32
    %3 = vector.broadcast %cst_1 : f32 to vector<32x1xf32>
    %4 = arith.divf %2, %3 : vector<32x1xf32>
    %5 = vector.broadcast %4 : vector<32x1xf32> to vector<32x128xf32>
    %6 = arith.subf %0, %5 : vector<32x128xf32>
    %7 = arith.mulf %6, %6 : vector<32x128xf32>
    %cst_2 = arith.constant dense<0.000000e+00> : vector<32xf32>
    %8 = vector.multi_reduction <add>, %7, %cst_2 [1] : vector<32x128xf32> to vector<32xf32>
    %9 = vector.shape_cast %8 : vector<32xf32> to vector<32x1xf32>
    %cst_3 = arith.constant 1.280000e+02 : f32
    %10 = vector.broadcast %cst_3 : f32 to vector<32x1xf32>
    %11 = arith.divf %9, %10 : vector<32x1xf32>
    %12 = vector.broadcast %4 : vector<32x1xf32> to vector<32x128xf32>
    %13 = arith.subf %0, %12 : vector<32x128xf32>
    %cst_4 = arith.constant 9.99999974E-6 : f32
    %14 = vector.broadcast %cst_4 : f32 to vector<32x1xf32>
    %15 = arith.addf %11, %14 : vector<32x1xf32>
    %16 = math.rsqrt %15 : vector<32x1xf32>
    %17 = vector.broadcast %16 : vector<32x1xf32> to vector<32x128xf32>
    %18 = arith.mulf %13, %17 : vector<32x128xf32>
    %c0_5 = arith.constant 0 : index
    %c0_6 = arith.constant 0 : index
    %19 = vector.load %arg2[%c0_5, %c0_6] : memref<1x128xf32, #tpu.memory_space<vmem>>, vector<1x128xf32>
    %20 = vector.broadcast %19 : vector<1x128xf32> to vector<32x128xf32>
    %21 = arith.mulf %18, %20 : vector<32x128xf32>
    %c0_7 = arith.constant 0 : index
    %c0_8 = arith.constant 0 : index
    %22 = vector.load %arg3[%c0_7, %c0_8] : memref<1x128xf32, #tpu.memory_space<vmem>>, vector<1x128xf32>
    %23 = vector.broadcast %22 : vector<1x128xf32> to vector<32x128xf32>
    %24 = arith.addf %21, %23 : vector<32x128xf32>
    %25 = arith.truncf %24 : vector<32x128xf32> to vector<32x128xbf16>
    %c0_9 = arith.constant 0 : index
    %c0_10 = arith.constant 0 : index
    %26 = vector.load %arg4[%c0_9, %c0_10] : memref<128x128xbf16, #tpu.memory_space<vmem>>, vector<128x128xbf16>
    %cst_11 = arith.constant dense<0.000000e+00> : vector<32x128xf32>
    %27 = tpu.matmul %25, %26, %cst_11 {dimension_numbers = #tpu.dot_dimension_numbers<[1], [0], [0], [1], [0, 0, 1, 1], [], []>} : vector<32x128xbf16>, vector<128x128xbf16>, vector<32x128xf32> -> vector<32x128xf32>
    %c0_12 = arith.constant 0 : index
    %c0_13 = arith.constant 0 : index
    %28 = vector.load %arg5[%c0_12, %c0_13] : memref<1x128xf32, #tpu.memory_space<vmem>>, vector<1x128xf32>
    %29 = vector.broadcast %28 : vector<1x128xf32> to vector<32x128xf32>
    %30 = arith.addf %27, %29 : vector<32x128xf32>
    %31 = arith.truncf %30 : vector<32x128xf32> to vector<32x128xbf16>
    %c0_14 = arith.constant 0 : index
    %c0_15 = arith.constant 0 : index
    %32 = vector.load %arg10[%c0_14, %c0_15] : memref<32x128xbf16, #tpu.memory_space<vmem>>, vector<32x128xbf16>
    tpu.vector_store %arg10[%c0_14, %c0_15], %31 {strides = array<i32>} : memref<32x128xbf16, #tpu.memory_space<vmem>>, vector<32x128xbf16>,
    %c0_16 = arith.constant 0 : index
    %c0_17 = arith.constant 0 : index
    %33 = vector.load %arg6[%c0_16, %c0_17] : memref<128x128xbf16, #tpu.memory_space<vmem>>, vector<128x128xbf16>
    %cst_18 = arith.constant dense<0.000000e+00> : vector<32x128xf32>
    %34 = tpu.matmul %25, %33, %cst_18 {dimension_numbers = #tpu.dot_dimension_numbers<[1], [0], [0], [1], [0, 0, 1, 1], [], []>} : vector<32x128xbf16>, vector<128x128xbf16>, vector<32x128xf32> -> vector<32x128xf32>
    %c0_19 = arith.constant 0 : index
    %c0_20 = arith.constant 0 : index
    %35 = vector.load %arg7[%c0_19, %c0_20] : memref<1x128xf32, #tpu.memory_space<vmem>>, vector<1x128xf32>
    %36 = vector.broadcast %35 : vector<1x128xf32> to vector<32x128xf32>
    %37 = arith.addf %34, %36 : vector<32x128xf32>
    %38 = arith.truncf %37 : vector<32x128xf32> to vector<32x128xbf16>
    %c0_21 = arith.constant 0 : index
    %c0_22 = arith.constant 0 : index
    %39 = vector.load %arg11[%c0_21, %c0_22] : memref<32x128xbf16, #tpu.memory_space<vmem>>, vector<32x128xbf16>
    tpu.vector_store %arg11[%c0_21, %c0_22], %38 {strides = array<i32>} : memref<32x128xbf16, #tpu.memory_space<vmem>>, vector<32x128xbf16>,
    %c0_23 = arith.constant 0 : index
    %c0_24 = arith.constant 0 : index
    %40 = vector.load %arg8[%c0_23, %c0_24] : memref<128x128xbf16, #tpu.memory_space<vmem>>, vector<128x128xbf16>
    %cst_25 = arith.constant dense<0.000000e+00> : vector<32x128xf32>
    %41 = tpu.matmul %25, %40, %cst_25 {dimension_numbers = #tpu.dot_dimension_numbers<[1], [0], [0], [1], [0, 0, 1, 1], [], []>} : vector<32x128xbf16>, vector<128x128xbf16>, vector<32x128xf32> -> vector<32x128xf32>
    %c0_26 = arith.constant 0 : index
    %c0_27 = arith.constant 0 : index
    %42 = vector.load %arg9[%c0_26, %c0_27] : memref<1x128xf32, #tpu.memory_space<vmem>>, vector<1x128xf32>
    %43 = vector.broadcast %42 : vector<1x128xf32> to vector<32x128xf32>
    %44 = arith.addf %41, %43 : vector<32x128xf32>
    %45 = arith.truncf %44 : vector<32x128xf32> to vector<32x128xbf16>
    %c0_28 = arith.constant 0 : index
    %c0_29 = arith.constant 0 : index
    %46 = vector.load %arg12[%c0_28, %c0_29] : memref<32x128xbf16, #tpu.memory_space<vmem>>, vector<32x128xbf16>
    tpu.vector_store %arg12[%c0_28, %c0_29], %45 {strides = array<i32>} : memref<32x128xbf16, #tpu.memory_space<vmem>>, vector<32x128xbf16>,
    return
  }
  func.func @transform_0(%arg0: i32) -> (i32, i32) {
    %c0_i32 = arith.constant 0 : i32
    %c0_i32_0 = arith.constant 0 : i32
    return %arg0, %c0_i32 : i32, i32
  }
  func.func @transform_1(%arg0: i32) -> (i32, i32) {
    %c0_i32 = arith.constant 0 : i32
    %c0_i32_0 = arith.constant 0 : i32
    %c0_i32_1 = arith.constant 0 : i32
    return %c0_i32, %c0_i32_0 : i32, i32
  }
  func.func @transform_2(%arg0: i32) -> (i32, i32) {
    %c0_i32 = arith.constant 0 : i32
    %c0_i32_0 = arith.constant 0 : i32
    %c0_i32_1 = arith.constant 0 : i32
    return %c0_i32, %c0_i32_0 : i32, i32
  }
  func.func @transform_3(%arg0: i32) -> (i32, i32) {
    %c0_i32 = arith.constant 0 : i32
    %c0_i32_0 = arith.constant 0 : i32
    %c0_i32_1 = arith.constant 0 : i32
    return %c0_i32, %c0_i32_0 : i32, i32
  }
  func.func @transform_4(%arg0: i32) -> (i32, i32) {
    %c0_i32 = arith.constant 0 : i32
    %c0_i32_0 = arith.constant 0 : i32
    %c0_i32_1 = arith.constant 0 : i32
    return %c0_i32, %c0_i32_0 : i32, i32
  }
  func.func @transform_5(%arg0: i32) -> (i32, i32) {
    %c0_i32 = arith.constant 0 : i32
    %c0_i32_0 = arith.constant 0 : i32
    %c0_i32_1 = arith.constant 0 : i32
    return %c0_i32, %c0_i32_0 : i32, i32
  }
  func.func @transform_6(%arg0: i32) -> (i32, i32) {
    %c0_i32 = arith.constant 0 : i32
    %c0_i32_0 = arith.constant 0 : i32
    %c0_i32_1 = arith.constant 0 : i32
    return %c0_i32, %c0_i32_0 : i32, i32
  }
  func.func @transform_7(%arg0: i32) -> (i32, i32) {
    %c0_i32 = arith.constant 0 : i32
    %c0_i32_0 = arith.constant 0 : i32
    %c0_i32_1 = arith.constant 0 : i32
    return %c0_i32, %c0_i32_0 : i32, i32
  }
  func.func @transform_8(%arg0: i32) -> (i32, i32) {
    %c0_i32 = arith.constant 0 : i32
    %c0_i32_0 = arith.constant 0 : i32
    %c0_i32_1 = arith.constant 0 : i32
    return %c0_i32, %c0_i32_0 : i32, i32
  }
  func.func @transform_9(%arg0: i32) -> (i32, i32) {
    %c0_i32 = arith.constant 0 : i32
    %c0_i32_0 = arith.constant 0 : i32
    return %arg0, %c0_i32 : i32, i32
  }
  func.func @transform_10(%arg0: i32) -> (i32, i32) {
    %c0_i32 = arith.constant 0 : i32
    %c0_i32_0 = arith.constant 0 : i32
    return %arg0, %c0_i32 : i32, i32
  }
  func.func @transform_11(%arg0: i32) -> (i32, i32) {
    %c0_i32 = arith.constant 0 : i32
    %c0_i32_0 = arith.constant 0 : i32
    return %arg0, %c0_i32 : i32, i32
  }
}

</mosaic_0001>

<llo_original>
// kernel: tpu_custom_call.1
$region0: #{tpu_custom_call.1}
  #allocation0 [shape = 'u32[]', space=smem, size = 0x4, offset = 0x4, fixed_abs, tag = 'smem constant byte address 0x4 - core index']
  #allocation1 [shape = 'u32[72,128]{1,0:T(1,128)}', space=vmem, size = 0x9000, scoped, tag = 'internal scratch']
  %s0 = inlined_call_operand.hbm [shape: f32[16,128], index: 0, kind: input, shape index: {}]
  %s1 = inlined_call_operand.hbm [shape: f32[8,128], index: 1, kind: input, shape index: {}]
  %s2 = inlined_call_operand.hbm [shape: f32[16,128], index: 2, kind: output, shape index: {}]
  %s3 = sld [smem:[#allocation0]]
  $region49: #{tpu_custom_call.1} parent=0
    _
  %s5 = ssub.s32 1, %s3
  %s6 = scalar_select 0, %s5, %s3
  $region1: #{tpu_custom_call.1} parent=0
    #allocation2 [shape = 'u8[8192]{0}', space=vmem, size = 0x2000, scoped, tag = 'input window, operand 0']
    #allocation3 [shape = 's32[2]{0}', space=sflag, size = 0x8, scoped, tag = 'scoped memory for tpu_custom_call.1']
    #allocation4 [shape = 's32[2]{0}', space=sflag, size = 0x8, scoped, tag = 'scoped memory for tpu_custom_call.1']
    #allocation5 [shape = 'u8[4096]{0}', space=vmem, size = 0x1000, scoped, tag = 'input window, operand 1, single buffered']
    #allocation6 [shape = 's32[1]{0}', space=sflag, size = 0x4, scoped, tag = 'scoped memory for tpu_custom_call.1']
    #allocation7 [shape = 'u8[8192]{0}', space=vmem, size = 0x2000, scoped, tag = 'output window, operand 0']
    %7 = vsyncpa [#allocation3], 0
    %s8 = scalar_lea.sflag [#allocation3], 1
    %9 = vsyncpa %s8, 0
    %10 = vsyncpa [#allocation6], 0
    %11 = vsyncpa [#allocation4], 0
    %s12 = scalar_lea.sflag [#allocation4], 1
    %13 = vsyncpa %s12, 0
    loop: start=0, step=1, limit=4
    $region2: #{tpu_custom_call.1} parent=1 // loop_pre_header
      _
    $region3: #{tpu_custom_call.1} parent=1 // loop_header
      %s15 = sphi 0, %s19
      %p16 = scmp.ge.s32.totalorder %s15, 4
      %s25 = sphi 0, %s27
      %s28 = sphi 0, %s25
      %s29 = sphi 0, %s28
      %s45 = sphi 0, %s29
      %s49 = sphi 0, %s49
      %s51 = sphi 0, %s49
      %s52 = sphi 0, %s51
      %s66 = sphi 0, %s52
      %s72 = sphi 0, %s74
      %s75 = sphi 0, %s72
      %s76 = sphi 0, %s75
      %s92 = sphi 0, %s76
    $region4: #{tpu_custom_call.1} parent=1 // loop_header_branch
      %18 = sbr.rel (%p16) target = $region8
    $region5: #{tpu_custom_call.1} parent=1 // loop_body
      %s20 = ssub.s32 %s15, 1
      %s21 = ssub.s32 %s15, 2
      %s22 = sadd.s32 %s15, 1
      %s23 = ssub.s32 %s15, %s22
      %p24 = scmp.eq.s32.totalorder %s23, 0
      %s26 = sadd.s32 %s25, 1
      %s27 = scalar_select %p24, %s25, %s26
      %p30 = pneg %p24
      %p31 = scmp.eq.s32.totalorder %s15, 1
      %p32 = por %p30, %p31
      %p33 = scmp.ne.s32.totalorder %s25, %s28
      %p34 = scmp.eq.s32.totalorder %s15, 0
      %p35 = por %p33, %p34
      %p36 = scmp.ne.s32.totalorder %s25, %s28
      %p37 = scmp.eq.s32.totalorder %s20, 1
      %p38 = por %p36, %p37
      %p39 = scmp.ne.s32.totalorder %s28, %s29
      %p40 = scmp.eq.s32.totalorder %s20, 0
      %p41 = por %p39, %p40
      %p42 = scmp.ne.s32.totalorder %s28, %s29
      %p43 = scmp.eq.s32.totalorder %s21, 1
      %p44 = por %p42, %p43
      %p46 = scmp.ne.s32.totalorder %s29, %s45
      %p47 = scmp.eq.s32.totalorder %s21, 0
      %p48 = por %p46, %p47
      %s50 = sadd.s32 %s49, 1
      %p53 = scmp.eq.s32.totalorder %s15, 1
      %p54 = scmp.ne.s32.totalorder %s49, %s51
      %p55 = scmp.eq.s32.totalorder %s15, 0
      %p56 = por %p54, %p55
      %p57 = scmp.ne.s32.totalorder %s49, %s51
      %p58 = scmp.eq.s32.totalorder %s20, 1
      %p59 = por %p57, %p58
      %p60 = scmp.ne.s32.totalorder %s51, %s52
      %p61 = scmp.eq.s32.totalorder %s20, 0
      %p62 = por %p60, %p61
      %p63 = scmp.ne.s32.totalorder %s51, %s52
      %p64 = scmp.eq.s32.totalorder %s21, 1
      %p65 = por %p63, %p64
      %p67 = scmp.ne.s32.totalorder %s52, %s66
      %p68 = scmp.eq.s32.totalorder %s21, 0
      %p69 = por %p67, %p68
      %s70 = ssub.s32 %s15, %s22
      %p71 = scmp.eq.s32.totalorder %s70, 0
      %s73 = sadd.s32 %s72, 1
      %s74 = scalar_select %p71, %s72, %s73
      %p77 = pneg %p71
      %p78 = scmp.eq.s32.totalorder %s15, 1
      %p79 = por %p77, %p78
      %p80 = scmp.ne.s32.totalorder %s72, %s75
      %p81 = scmp.eq.s32.totalorder %s15, 0
      %p82 = por %p80, %p81
      %p83 = scmp.ne.s32.totalorder %s72, %s75
      %p84 = scmp.eq.s32.totalorder %s20, 1
      %p85 = por %p83, %p84
      %p86 = scmp.ne.s32.totalorder %s75, %s76
      %p87 = scmp.eq.s32.totalorder %s20, 0
      %p88 = por %p86, %p87
      %p89 = scmp.ne.s32.totalorder %s75, %s76
      %p90 = scmp.eq.s32.totalorder %s21, 1
      %p91 = por %p89, %p90
      %p93 = scmp.ne.s32.totalorder %s76, %s92
      %p94 = scmp.eq.s32.totalorder %s21, 0
      %p95 = por %p93, %p94
      %p96 = scmp.le.s32.totalorder 1, %s15
      %p97 = scmp.lt.s32.totalorder %s15, 3
      %p98 = pnand %p96, %p97
      %p99 = pneg %p98
      // Predicated region
      $region9: #{tpu_custom_call.1} parent=5 // pred_check
        _
      $region10: #{tpu_custom_call.1} parent=5 // pred_check_branch
        %101 = sbr.rel (%p98) target = $region12
      $region11: #{tpu_custom_call.1} parent=5 // pred_region
        %s102 = ssub.s32 %s15, 1
        // Predicated region
        $region13: #{tpu_custom_call.1} parent=11 // pred_check
          %p103 = pneg %p62
        $region14: #{tpu_custom_call.1} parent=11 // pred_check_branch
          %105 = sbr.rel (%p103) target = $region16
        $region15: #{tpu_custom_call.1} parent=11 // pred_region
          %107 = vsyncadd [#allocation6], 0
          %s109 = sshll.u32 %s1, 4
          %s110 = int_to_ptr.hbm [resolvable:$true] %s109
          %s111 = sshll.u32 [#allocation5], 4
          %s112 = int_to_ptr.vmem [resolvable:$true] %s111
          %114 = dma.hbm_to_vmem [thread:$0]  %s110, 128, %s112, [#allocation6]
        $region16: #{tpu_custom_call.1} parent=11 // pred_fallthru
          _
      $region12: #{tpu_custom_call.1} parent=5 // pred_fallthru
        _
      %p115 = scmp.lt.s32.totalorder %s15, 2
      // Predicated region
      $region17: #{tpu_custom_call.1} parent=5 // pred_check
        %p116 = pneg %p115
      $region18: #{tpu_custom_call.1} parent=5 // pred_check_branch
        %118 = sbr.rel (%p116) target = $region20
      $region19: #{tpu_custom_call.1} parent=5 // pred_region
        // Predicated region
        $region21: #{tpu_custom_call.1} parent=19 // pred_check
          %p119 = pneg %p35
        $region22: #{tpu_custom_call.1} parent=19 // pred_check_branch
          %121 = sbr.rel (%p119) target = $region24
        $region23: #{tpu_custom_call.1} parent=19 // pred_region
          %s122 = sand.u32 %s25, 1
          %s123 = scalar_lea.sflag [#allocation3], %s122
          %s124 = sand.u32 %s25, 1
          %s125 = smul.addr %s124, 8
          %s126 = scalar_lea.vmem [#allocation2], %s125
          %128 = vsyncadd %s123, 0
          %s129 = smul.addr %s15, 8
          %s130 = scalar_lea.hbm %s0, %s129
          %s132 = sshll.u32 %s130, 4
          %s133 = int_to_ptr.hbm [resolvable:$true] %s132
          %s134 = sshll.u32 %s126, 4
          %s135 = int_to_ptr.vmem [resolvable:$true] %s134
          %137 = dma.hbm_to_vmem [thread:$0]  %s133, 128, %s135, %s123
        $region24: #{tpu_custom_call.1} parent=19 // pred_fallthru
          _
      $region20: #{tpu_custom_call.1} parent=5 // pred_fallthru
        _
      %p138 = scmp.le.s32.totalorder 1, %s15
      %p139 = scmp.lt.s32.totalorder %s15, 3
      %p140 = pnand %p138, %p139
      %p141 = pneg %p140
      // Predicated region
      $region25: #{tpu_custom_call.1} parent=5 // pred_check
        _
      $region26: #{tpu_custom_call.1} parent=5 // pred_check_branch
        %143 = sbr.rel (%p140) target = $region28
      $region27: #{tpu_custom_call.1} parent=5 // pred_region
        %s144 = ssub.s32 %s15, 1
        %s145 = sand.u32 %s28, 1
        %s146 = scalar_lea.sflag [#allocation3], %s145
        %s147 = sand.u32 %s28, 1
        %s148 = smul.addr %s147, 8
        %s149 = scalar_lea.vmem [#allocation2], %s148
        // Predicated region
        $region29: #{tpu_custom_call.1} parent=27 // pred_check
          %p150 = pneg %p41
        $region30: #{tpu_custom_call.1} parent=27 // pred_check_branch
          %152 = sbr.rel (%p150) target = $region32
        $region31: #{tpu_custom_call.1} parent=27 // pred_region
          %154 = dma.done %s146, 128
        $region32: #{tpu_custom_call.1} parent=27 // pred_fallthru
          _
        // Predicated region
        $region33: #{tpu_custom_call.1} parent=27 // pred_check
          %p155 = pneg %p62
        $region34: #{tpu_custom_call.1} parent=27 // pred_check_branch
          %157 = sbr.rel (%p155) target = $region36
        $region35: #{tpu_custom_call.1} parent=27 // pred_region
          %159 = dma.done [#allocation6], 128
        $region36: #{tpu_custom_call.1} parent=27 // pred_fallthru
          _
        %s160 = sand.u32 %s28, 1
        %s161 = scalar_lea.sflag [#allocation3], %s160
        %s162 = sand.u32 %s28, 1
        %s163 = smul.addr %s162, 8
        %s164 = scalar_lea.vmem [#allocation2], %s163
        %p165 = pneg %p41
        %p166 = pneg %p38
        %p167 = pneg %p62
        %p168 = pneg %p59
        %p169 = pneg %p88
        %p170 = pneg %p85
        %s171 = sand.u32 %s75, 1
        %s172 = scalar_lea.sflag [#allocation4], %s171
        %s173 = sand.u32 %s75, 1
        %s174 = smul.addr %s173, 8
        %s175 = scalar_lea.vmem [#allocation7], %s174
        %v176 = vld [vmem:[%s149] sm:$0xff]
        %v177 = vld [vmem:[#allocation5] sm:$0xff]
        %v178 = vadd.f32 %v176, %v177
        %179 = vst [vmem:[%s175] sm:$0xff] %v178
        %s180 = sand.u32 %s75, 1
        %s181 = scalar_lea.sflag [#allocation4], %s180
        %s182 = sand.u32 %s75, 1
        %s183 = smul.addr %s182, 8
        %s184 = scalar_lea.vmem [#allocation7], %s183
        // Predicated region
        $region37: #{tpu_custom_call.1} parent=27 // pred_check
          %p185 = pneg %p85
        $region38: #{tpu_custom_call.1} parent=27 // pred_check_branch
          %187 = sbr.rel (%p185) target = $region40
        $region39: #{tpu_custom_call.1} parent=27 // pred_region
          %189 = vsyncadd %s181, 0
          %s190 = smul.addr %s20, 8
          %s191 = scalar_lea.hbm %s2, %s190
          %s193 = sshll.u32 %s184, 4
          %s194 = int_to_ptr.vmem [resolvable:$true] %s193
          %s195 = sshll.u32 %s191, 4
          %s196 = int_to_ptr.hbm [resolvable:$true] %s195
          %198 = dma.vmem_to_hbm [thread:$0]  %s194, 128, %s196, %s181
        $region40: #{tpu_custom_call.1} parent=27 // pred_fallthru
          _
      $region28: #{tpu_custom_call.1} parent=5 // pred_fallthru
        _
      %p199 = scmp.le.s32.totalorder 2, %s15
      // Predicated region
      $region41: #{tpu_custom_call.1} parent=5 // pred_check
        %p200 = pneg %p199
      $region42: #{tpu_custom_call.1} parent=5 // pred_check_branch
        %202 = sbr.rel (%p200) target = $region44
      $region43: #{tpu_custom_call.1} parent=5 // pred_region
        %s203 = ssub.s32 %s15, 2
        // Predicated region
        $region45: #{tpu_custom_call.1} parent=43 // pred_check
          %p204 = pneg %p91
        $region46: #{tpu_custom_call.1} parent=43 // pred_check_branch
          %206 = sbr.rel (%p204) target = $region48
        $region47: #{tpu_custom_call.1} parent=43 // pred_region
          %s207 = sand.u32 %s76, 1
          %s208 = scalar_lea.sflag [#allocation4], %s207
          %s209 = sand.u32 %s76, 1
          %s210 = smul.addr %s209, 8
          %s211 = scalar_lea.vmem [#allocation7], %s210
          %213 = dma.done %s208, 128
        $region48: #{tpu_custom_call.1} parent=43 // pred_fallthru
          _
      $region44: #{tpu_custom_call.1} parent=5 // pred_fallthru
        _
    $region6: #{tpu_custom_call.1} parent=1 // loop_footer
      %s19 = sadd.s32 1, %s15
    $region7: #{tpu_custom_call.1} parent=1 // loop_footer_branch
      %14 = sbr.rel target = $region3
    $region8: #{tpu_custom_call.1} parent=1 // loop_exit
      _
    %214 = vsyncpa [#allocation3], 1
    %s215 = scalar_lea.sflag [#allocation3], 1
    %216 = vsyncpa %s215, 1
    %217 = vsyncpa [#allocation6], 1
    %218 = vsyncpa [#allocation4], 1
    %s219 = scalar_lea.sflag [#allocation4], 1
    %220 = vsyncpa %s219, 1

// kernel: tpu_custom_call.1
$region0: #{tpu_custom_call.1}
  #allocation0 [shape = 'u32[]', space=smem, size = 0x4, offset = 0x4, fixed_abs, tag = 'smem constant byte address 0x4 - core index']
  #allocation1 [shape = 'u32[72,128]{1,0:T(1,128)}', space=vmem, size = 0x9000, scoped, tag = 'internal scratch']
  %s0 = inlined_call_operand.hbm [shape: f32[64,128], index: 0, kind: input, shape index: {}]
  %s1 = inlined_call_operand.hbm [shape: f32[1,128], index: 1, kind: input, shape index: {}]
  %s2 = inlined_call_operand.vmem [shape: f32[1,128], index: 2, kind: input, shape index: {}]
  %s3 = inlined_call_operand.hbm [shape: bf16[128,128], index: 3, kind: input, shape index: {}]
  %s4 = inlined_call_operand.vmem [shape: f32[1,128], index: 4, kind: input, shape index: {}]
  %s5 = inlined_call_operand.hbm [shape: bf16[128,128], index: 5, kind: input, shape index: {}]
  %s6 = inlined_call_operand.vmem [shape: f32[1,128], index: 6, kind: input, shape index: {}]
  %s7 = inlined_call_operand.hbm [shape: bf16[128,128], index: 7, kind: input, shape index: {}]
  %s8 = inlined_call_operand.vmem [shape: f32[1,128], index: 8, kind: input, shape index: {}]
  %s9 = inlined_call_operand.hbm [shape: bf16[64,128], index: 9, kind: output, shape index: {0}]
  %s10 = inlined_call_operand.hbm [shape: bf16[64,128], index: 10, kind: output, shape index: {1}]
  %s11 = inlined_call_operand.hbm [shape: bf16[64,128], index: 11, kind: output, shape index: {2}]
  %12 = xla_tuple %s9, %s10, %s11
  %s13 = sld [smem:[#allocation0]]
  $region105: #{tpu_custom_call.1} parent=0
    _
  %s15 = ssub.s32 1, %s13
  %s16 = scalar_select 0, %s15, %s13
  $region1: #{tpu_custom_call.1} parent=0
    #allocation2 [shape = 'u8[32768]{0}', space=vmem, size = 0x8000, scoped, tag = 'input window, operand 0']
    #allocation3 [shape = 's32[2]{0}', space=sflag, size = 0x8, scoped, tag = 'scoped memory for tpu_custom_call.1']
    #allocation4 [shape = 's32[2]{0}', space=sflag, size = 0x8, scoped, tag = 'scoped memory for tpu_custom_call.1']
    #allocation5 [shape = 'u8[512]{0}', space=vmem, size = 0x400, scoped, tag = 'input window, operand 1, single buffered']
    #allocation6 [shape = 's32[1]{0}', space=sflag, size = 0x4, scoped, tag = 'scoped memory for tpu_custom_call.1']
    #allocation7 [shape = 'u8[32768]{0}', space=vmem, size = 0x8000, scoped, tag = 'input window, operand 3, single buffered']
    #allocation8 [shape = 'u8[32768]{0}', space=vmem, size = 0x8000, scoped, tag = 'input window, operand 5, single buffered']
    #allocation9 [shape = 's32[1]{0}', space=sflag, size = 0x4, scoped, tag = 'scoped memory for tpu_custom_call.1']
    #allocation10 [shape = 'u8[32768]{0}', space=vmem, size = 0x8000, scoped, tag = 'input window, operand 7, single buffered']
    #allocation11 [shape = 'u8[16384]{0}', space=vmem, size = 0x4000, scoped, tag = 'output window, operand 0']
    #allocation12 [shape = 'u8[16384]{0}', space=vmem, size = 0x4000, scoped, tag = 'output window, operand 1']
    #allocation13 [shape = 's32[2]{0}', space=sflag, size = 0x8, scoped, tag = 'scoped memory for tpu_custom_call.1']
    #allocation14 [shape = 'u8[16384]{0}', space=vmem, size = 0x4000, scoped, tag = 'output window, operand 2']
    %17 = vsyncpa [#allocation3], 0
    %s18 = scalar_lea.sflag [#allocation3], 1
    %19 = vsyncpa %s18, 0
    %20 = vsyncpa [#allocation6], 0
    %21 = vsyncpa [#allocation9], 0
    %22 = vsyncpa [#allocation4], 0
    %s23 = scalar_lea.sflag [#allocation4], 1
    %24 = vsyncpa %s23, 0
    %25 = vsyncpa [#allocation13], 0
    %s26 = scalar_lea.sflag [#allocation13], 1
    %27 = vsyncpa %s26, 0
    loop: start=0, step=1, limit=4
    $region2: #{tpu_custom_call.1} parent=1 // loop_pre_header
      _
    $region3: #{tpu_custom_call.1} parent=1 // loop_header
      %s29 = sphi 0, %s33
      %p30 = scmp.ge.s32.totalorder %s29, 4
      %s39 = sphi 0, %s41
      %s42 = sphi 0, %s39
      %s43 = sphi 0, %s42
      %s59 = sphi 0, %s43
      %s63 = sphi 0, %s63
      %s65 = sphi 0, %s63
      %s66 = sphi 0, %s65
      %s80 = sphi 0, %s66
      %s84 = sphi 0, %s84
      %s86 = sphi 0, %s84
      %s87 = sphi 0, %s86
      %s101 = sphi 0, %s87
      %s105 = sphi 0, %s105
      %s107 = sphi 0, %s105
      %s108 = sphi 0, %s107
      %s122 = sphi 0, %s108
      %s126 = sphi 0, %s126
      %s128 = sphi 0, %s126
      %s129 = sphi 0, %s128
      %s143 = sphi 0, %s129
      %s147 = sphi 0, %s147
      %s149 = sphi 0, %s147
      %s150 = sphi 0, %s149
      %s164 = sphi 0, %s150
      %s168 = sphi 0, %s168
      %s170 = sphi 0, %s168
      %s171 = sphi 0, %s170
      %s185 = sphi 0, %s171
      %s189 = sphi 0, %s189
      %s191 = sphi 0, %s189
      %s192 = sphi 0, %s191
      %s206 = sphi 0, %s192
      %s210 = sphi 0, %s210
      %s212 = sphi 0, %s210
      %s213 = sphi 0, %s212
      %s227 = sphi 0, %s213
      %s233 = sphi 0, %s235
      %s236 = sphi 0, %s233
      %s237 = sphi 0, %s236
      %s253 = sphi 0, %s237
      %s259 = sphi 0, %s261
      %s262 = sphi 0, %s259
      %s263 = sphi 0, %s262
      %s279 = sphi 0, %s263
      %s285 = sphi 0, %s287
      %s288 = sphi 0, %s285
      %s289 = sphi 0, %s288
      %s305 = sphi 0, %s289
    $region4: #{tpu_custom_call.1} parent=1 // loop_header_branch
      %32 = sbr.rel (%p30) target = $region8
    $region5: #{tpu_custom_call.1} parent=1 // loop_body
      %s34 = ssub.s32 %s29, 1
      %s35 = ssub.s32 %s29, 2
      %s36 = sadd.s32 %s29, 1
      %s37 = ssub.s32 %s29, %s36
      %p38 = scmp.eq.s32.totalorder %s37, 0
      %s40 = sadd.s32 %s39, 1
      %s41 = scalar_select %p38, %s39, %s40
      %p44 = pneg %p38
      %p45 = scmp.eq.s32.totalorder %s29, 1
      %p46 = por %p44, %p45
      %p47 = scmp.ne.s32.totalorder %s39, %s42
      %p48 = scmp.eq.s32.totalorder %s29, 0
      %p49 = por %p47, %p48
      %p50 = scmp.ne.s32.totalorder %s39, %s42
      %p51 = scmp.eq.s32.totalorder %s34, 1
      %p52 = por %p50, %p51
      %p53 = scmp.ne.s32.totalorder %s42, %s43
      %p54 = scmp.eq.s32.totalorder %s34, 0
      %p55 = por %p53, %p54
      %p56 = scmp.ne.s32.totalorder %s42, %s43
      %p57 = scmp.eq.s32.totalorder %s35, 1
      %p58 = por %p56, %p57
      %p60 = scmp.ne.s32.totalorder %s43, %s59
      %p61 = scmp.eq.s32.totalorder %s35, 0
      %p62 = por %p60, %p61
      %s64 = sadd.s32 %s63, 1
      %p67 = scmp.eq.s32.totalorder %s29, 1
      %p68 = scmp.ne.s32.totalorder %s63, %s65
      %p69 = scmp.eq.s32.totalorder %s29, 0
      %p70 = por %p68, %p69
      %p71 = scmp.ne.s32.totalorder %s63, %s65
      %p72 = scmp.eq.s32.totalorder %s34, 1
      %p73 = por %p71, %p72
      %p74 = scmp.ne.s32.totalorder %s65, %s66
      %p75 = scmp.eq.s32.totalorder %s34, 0
      %p76 = por %p74, %p75
      %p77 = scmp.ne.s32.totalorder %s65, %s66
      %p78 = scmp.eq.s32.totalorder %s35, 1
      %p79 = por %p77, %p78
      %p81 = scmp.ne.s32.totalorder %s66, %s80
      %p82 = scmp.eq.s32.totalorder %s35, 0
      %p83 = por %p81, %p82
      %s85 = sadd.s32 %s84, 1
      %p88 = scmp.eq.s32.totalorder %s29, 1
      %p89 = scmp.ne.s32.totalorder %s84, %s86
      %p90 = scmp.eq.s32.totalorder %s29, 0
      %p91 = por %p89, %p90
      %p92 = scmp.ne.s32.totalorder %s84, %s86
      %p93 = scmp.eq.s32.totalorder %s34, 1
      %p94 = por %p92, %p93
      %p95 = scmp.ne.s32.totalorder %s86, %s87
      %p96 = scmp.eq.s32.totalorder %s34, 0
      %p97 = por %p95, %p96
      %p98 = scmp.ne.s32.totalorder %s86, %s87
      %p99 = scmp.eq.s32.totalorder %s35, 1
      %p100 = por %p98, %p99
      %p102 = scmp.ne.s32.totalorder %s87, %s101
      %p103 = scmp.eq.s32.totalorder %s35, 0
      %p104 = por %p102, %p103
      %s106 = sadd.s32 %s105, 1
      %p109 = scmp.eq.s32.totalorder %s29, 1
      %p110 = scmp.ne.s32.totalorder %s105, %s107
      %p111 = scmp.eq.s32.totalorder %s29, 0
      %p112 = por %p110, %p111
      %p113 = scmp.ne.s32.totalorder %s105, %s107
      %p114 = scmp.eq.s32.totalorder %s34, 1
      %p115 = por %p113, %p114
      %p116 = scmp.ne.s32.totalorder %s107, %s108
      %p117 = scmp.eq.s32.totalorder %s34, 0
      %p118 = por %p116, %p117
      %p119 = scmp.ne.s32.totalorder %s107, %s108
      %p120 = scmp.eq.s32.totalorder %s35, 1
      %p121 = por %p119, %p120
      %p123 = scmp.ne.s32.totalorder %s108, %s122
      %p124 = scmp.eq.s32.totalorder %s35, 0
      %p125 = por %p123, %p124
      %s127 = sadd.s32 %s126, 1
      %p130 = scmp.eq.s32.totalorder %s29, 1
      %p131 = scmp.ne.s32.totalorder %s126, %s128
      %p132 = scmp.eq.s32.totalorder %s29, 0
      %p133 = por %p131, %p132
      %p134 = scmp.ne.s32.totalorder %s126, %s128
      %p135 = scmp.eq.s32.totalorder %s34, 1
      %p136 = por %p134, %p135
      %p137 = scmp.ne.s32.totalorder %s128, %s129
      %p138 = scmp.eq.s32.totalorder %s34, 0
      %p139 = por %p137, %p138
      %p140 = scmp.ne.s32.totalorder %s128, %s129
      %p141 = scmp.eq.s32.totalorder %s35, 1
      %p142 = por %p140, %p141
      %p144 = scmp.ne.s32.totalorder %s129, %s143
      %p145 = scmp.eq.s32.totalorder %s35, 0
      %p146 = por %p144, %p145
      %s148 = sadd.s32 %s147, 1
      %p151 = scmp.eq.s32.totalorder %s29, 1
      %p152 = scmp.ne.s32.totalorder %s147, %s149
      %p153 = scmp.eq.s32.totalorder %s29, 0
      %p154 = por %p152, %p153
      %p155 = scmp.ne.s32.totalorder %s147, %s149
      %p156 = scmp.eq.s32.totalorder %s34, 1
      %p157 = por %p155, %p156
      %p158 = scmp.ne.s32.totalorder %s149, %s150
      %p159 = scmp.eq.s32.totalorder %s34, 0
      %p160 = por %p158, %p159
      %p161 = scmp.ne.s32.totalorder %s149, %s150
      %p162 = scmp.eq.s32.totalorder %s35, 1
      %p163 = por %p161, %p162
      %p165 = scmp.ne.s32.totalorder %s150, %s164
      %p166 = scmp.eq.s32.totalorder %s35, 0
      %p167 = por %p165, %p166
      %s169 = sadd.s32 %s168, 1
      %p172 = scmp.eq.s32.totalorder %s29, 1
      %p173 = scmp.ne.s32.totalorder %s168, %s170
      %p174 = scmp.eq.s32.totalorder %s29, 0
      %p175 = por %p173, %p174
      %p176 = scmp.ne.s32.totalorder %s168, %s170
      %p177 = scmp.eq.s32.totalorder %s34, 1
      %p178 = por %p176, %p177
      %p179 = scmp.ne.s32.totalorder %s170, %s171
      %p180 = scmp.eq.s32.totalorder %s34, 0
      %p181 = por %p179, %p180
      %p182 = scmp.ne.s32.totalorder %s170, %s171
      %p183 = scmp.eq.s32.totalorder %s35, 1
      %p184 = por %p182, %p183
      %p186 = scmp.ne.s32.totalorder %s171, %s185
      %p187 = scmp.eq.s32.totalorder %s35, 0
      %p188 = por %p186, %p187
      %s190 = sadd.s32 %s189, 1
      %p193 = scmp.eq.s32.totalorder %s29, 1
      %p194 = scmp.ne.s32.totalorder %s189, %s191
      %p195 = scmp.eq.s32.totalorder %s29, 0
      %p196 = por %p194, %p195
      %p197 = scmp.ne.s32.totalorder %s189, %s191
      %p198 = scmp.eq.s32.totalorder %s34, 1
      %p199 = por %p197, %p198
      %p200 = scmp.ne.s32.totalorder %s191, %s192
      %p201 = scmp.eq.s32.totalorder %s34, 0
      %p202 = por %p200, %p201
      %p203 = scmp.ne.s32.totalorder %s191, %s192
      %p204 = scmp.eq.s32.totalorder %s35, 1
      %p205 = por %p203, %p204
      %p207 = scmp.ne.s32.totalorder %s192, %s206
      %p208 = scmp.eq.s32.totalorder %s35, 0
      %p209 = por %p207, %p208
      %s211 = sadd.s32 %s210, 1
      %p214 = scmp.eq.s32.totalorder %s29, 1
      %p215 = scmp.ne.s32.totalorder %s210, %s212
      %p216 = scmp.eq.s32.totalorder %s29, 0
      %p217 = por %p215, %p216
      %p218 = scmp.ne.s32.totalorder %s210, %s212
      %p219 = scmp.eq.s32.totalorder %s34, 1
      %p220 = por %p218, %p219
      %p221 = scmp.ne.s32.totalorder %s212, %s213
      %p222 = scmp.eq.s32.totalorder %s34, 0
      %p223 = por %p221, %p222
      %p224 = scmp.ne.s32.totalorder %s212, %s213
      %p225 = scmp.eq.s32.totalorder %s35, 1
      %p226 = por %p224, %p225
      %p228 = scmp.ne.s32.totalorder %s213, %s227
      %p229 = scmp.eq.s32.totalorder %s35, 0
      %p230 = por %p228, %p229
      %s231 = ssub.s32 %s29, %s36
      %p232 = scmp.eq.s32.totalorder %s231, 0
      %s234 = sadd.s32 %s233, 1
      %s235 = scalar_select %p232, %s233, %s234
      %p238 = pneg %p232
      %p239 = scmp.eq.s32.totalorder %s29, 1
      %p240 = por %p238, %p239
      %p241 = scmp.ne.s32.totalorder %s233, %s236
      %p242 = scmp.eq.s32.totalorder %s29, 0
      %p243 = por %p241, %p242
      %p244 = scmp.ne.s32.totalorder %s233, %s236
      %p245 = scmp.eq.s32.totalorder %s34, 1
      %p246 = por %p244, %p245
      %p247 = scmp.ne.s32.totalorder %s236, %s237
      %p248 = scmp.eq.s32.totalorder %s34, 0
      %p249 = por %p247, %p248
      %p250 = scmp.ne.s32.totalorder %s236, %s237
      %p251 = scmp.eq.s32.totalorder %s35, 1
      %p252 = por %p250, %p251
      %p254 = scmp.ne.s32.totalorder %s237, %s253
      %p255 = scmp.eq.s32.totalorder %s35, 0
      %p256 = por %p254, %p255
      %s257 = ssub.s32 %s29, %s36
      %p258 = scmp.eq.s32.totalorder %s257, 0
      %s260 = sadd.s32 %s259, 1
      %s261 = scalar_select %p258, %s259, %s260
      %p264 = pneg %p258
      %p265 = scmp.eq.s32.totalorder %s29, 1
      %p266 = por %p264, %p265
      %p267 = scmp.ne.s32.totalorder %s259, %s262
      %p268 = scmp.eq.s32.totalorder %s29, 0
      %p269 = por %p267, %p268
      %p270 = scmp.ne.s32.totalorder %s259, %s262
      %p271 = scmp.eq.s32.totalorder %s34, 1
      %p272 = por %p270, %p271
      %p273 = scmp.ne.s32.totalorder %s262, %s263
      %p274 = scmp.eq.s32.totalorder %s34, 0
      %p275 = por %p273, %p274
      %p276 = scmp.ne.s32.totalorder %s262, %s263
      %p277 = scmp.eq.s32.totalorder %s35, 1
      %p278 = por %p276, %p277
      %p280 = scmp.ne.s32.totalorder %s263, %s279
      %p281 = scmp.eq.s32.totalorder %s35, 0
      %p282 = por %p280, %p281
      %s283 = ssub.s32 %s29, %s36
      %p284 = scmp.eq.s32.totalorder %s283, 0
      %s286 = sadd.s32 %s285, 1
      %s287 = scalar_select %p284, %s285, %s286
      %p290 = pneg %p284
      %p291 = scmp.eq.s32.totalorder %s29, 1
      %p292 = por %p290, %p291
      %p293 = scmp.ne.s32.totalorder %s285, %s288
      %p294 = scmp.eq.s32.totalorder %s29, 0
      %p295 = por %p293, %p294
      %p296 = scmp.ne.s32.totalorder %s285, %s288
      %p297 = scmp.eq.s32.totalorder %s34, 1
      %p298 = por %p296, %p297
      %p299 = scmp.ne.s32.totalorder %s288, %s289
      %p300 = scmp.eq.s32.totalorder %s34, 0
      %p301 = por %p299, %p300
      %p302 = scmp.ne.s32.totalorder %s288, %s289
      %p303 = scmp.eq.s32.totalorder %s35, 1
      %p304 = por %p302, %p303
      %p306 = scmp.ne.s32.totalorder %s289, %s305
      %p307 = scmp.eq.s32.totalorder %s35, 0
      %p308 = por %p306, %p307
      %p309 = scmp.le.s32.totalorder 1, %s29
      %p310 = scmp.lt.s32.totalorder %s29, 3
      %p311 = pnand %p309, %p310
      %p312 = pneg %p311
      // Predicated region
      $region9: #{tpu_custom_call.1} parent=5 // pred_check
        _
      $region10: #{tpu_custom_call.1} parent=5 // pred_check_branch
        %314 = sbr.rel (%p311) target = $region12
      $region11: #{tpu_custom_call.1} parent=5 // pred_region
        %s315 = ssub.s32 %s29, 1
        // Predicated region
        $region13: #{tpu_custom_call.1} parent=11 // pred_check
          %p316 = pneg %p76
        $region14: #{tpu_custom_call.1} parent=11 // pred_check_branch
          %318 = sbr.rel (%p316) target = $region16
        $region15: #{tpu_custom_call.1} parent=11 // pred_region
          %320 = vsyncadd [#allocation6], 0
          %s322 = sshll.u32 %s1, 4
          %s323 = int_to_ptr.hbm [resolvable:$true] %s322
          %s324 = sshll.u32 [#allocation5], 4
          %s325 = int_to_ptr.vmem [resolvable:$true] %s324
          %327 = dma.hbm_to_vmem [thread:$0]  %s323, 16, %s325, [#allocation6]
        $region16: #{tpu_custom_call.1} parent=11 // pred_fallthru
          _
        // Predicated region
        $region17: #{tpu_custom_call.1} parent=11 // pred_check
          %p328 = pneg %p97
        $region18: #{tpu_custom_call.1} parent=11 // pred_check_branch
          %330 = sbr.rel (%p328) target = $region20
        $region19: #{tpu_custom_call.1} parent=11 // pred_region
          _
        $region20: #{tpu_custom_call.1} parent=11 // pred_fallthru
          _
        // Predicated region
        $region21: #{tpu_custom_call.1} parent=11 // pred_check
          %p331 = pneg %p118
        $region22: #{tpu_custom_call.1} parent=11 // pred_check_branch
          %333 = sbr.rel (%p331) target = $region24
        $region23: #{tpu_custom_call.1} parent=11 // pred_region
          %335 = vsyncadd [#allocation6], 0
          %s336 = sshll.u32 %s3, 4
          %s337 = int_to_ptr.hbm [resolvable:$true] %s336
          %s338 = sshll.u32 [#allocation7], 4
          %s339 = int_to_ptr.vmem [resolvable:$true] %s338
          %344 = dma.hbm_to_vmem [thread:$0]  %s337, 1024, %s339, [#allocation6], 64, 64, 4
        $region24: #{tpu_custom_call.1} parent=11 // pred_fallthru
          _
        // Predicated region
        $region25: #{tpu_custom_call.1} parent=11 // pred_check
          %p345 = pneg %p139
        $region26: #{tpu_custom_call.1} parent=11 // pred_check_branch
          %347 = sbr.rel (%p345) target = $region28
        $region27: #{tpu_custom_call.1} parent=11 // pred_region
          _
        $region28: #{tpu_custom_call.1} parent=11 // pred_fallthru
          _
        // Predicated region
        $region29: #{tpu_custom_call.1} parent=11 // pred_check
          %p348 = pneg %p160
        $region30: #{tpu_custom_call.1} parent=11 // pred_check_branch
          %350 = sbr.rel (%p348) target = $region32
        $region31: #{tpu_custom_call.1} parent=11 // pred_region
          %352 = vsyncadd [#allocation9], 0
          %s353 = sshll.u32 %s5, 4
          %s354 = int_to_ptr.hbm [resolvable:$true] %s353
          %s355 = sshll.u32 [#allocation8], 4
          %s356 = int_to_ptr.vmem [resolvable:$true] %s355
          %361 = dma.hbm_to_vmem [thread:$0]  %s354, 1024, %s356, [#allocation9], 64, 64, 4
        $region32: #{tpu_custom_call.1} parent=11 // pred_fallthru
          _
        // Predicated region
        $region33: #{tpu_custom_call.1} parent=11 // pred_check
          %p362 = pneg %p181
        $region34: #{tpu_custom_call.1} parent=11 // pred_check_branch
          %364 = sbr.rel (%p362) target = $region36
        $region35: #{tpu_custom_call.1} parent=11 // pred_region
          _
        $region36: #{tpu_custom_call.1} parent=11 // pred_fallthru
          _
        // Predicated region
        $region37: #{tpu_custom_call.1} parent=11 // pred_check
          %p365 = pneg %p202
        $region38: #{tpu_custom_call.1} parent=11 // pred_check_branch
          %367 = sbr.rel (%p365) target = $region40
        $region39: #{tpu_custom_call.1} parent=11 // pred_region
          %369 = vsyncadd [#allocation9], 0
          %s370 = sshll.u32 %s7, 4
          %s371 = int_to_ptr.hbm [resolvable:$true] %s370
          %s372 = sshll.u32 [#allocation10], 4
          %s373 = int_to_ptr.vmem [resolvable:$true] %s372
          %378 = dma.hbm_to_vmem [thread:$0]  %s371, 1024, %s373, [#allocation9], 64, 64, 4
        $region40: #{tpu_custom_call.1} parent=11 // pred_fallthru
          _
        // Predicated region
        $region41: #{tpu_custom_call.1} parent=11 // pred_check
          %p379 = pneg %p223
        $region42: #{tpu_custom_call.1} parent=11 // pred_check_branch
          %381 = sbr.rel (%p379) target = $region44
        $region43: #{tpu_custom_call.1} parent=11 // pred_region
          _
        $region44: #{tpu_custom_call.1} parent=11 // pred_fallthru
          _
      $region12: #{tpu_custom_call.1} parent=5 // pred_fallthru
        _
      %p382 = scmp.lt.s32.totalorder %s29, 2
      // Predicated region
      $region45: #{tpu_custom_call.1} parent=5 // pred_check
        %p383 = pneg %p382
      $region46: #{tpu_custom_call.1} parent=5 // pred_check_branch
        %385 = sbr.rel (%p383) target = $region48
      $region47: #{tpu_custom_call.1} parent=5 // pred_region
        // Predicated region
        $region49: #{tpu_custom_call.1} parent=47 // pred_check
          %p386 = pneg %p49
        $region50: #{tpu_custom_call.1} parent=47 // pred_check_branch
          %388 = sbr.rel (%p386) target = $region52
        $region51: #{tpu_custom_call.1} parent=47 // pred_region
          %s389 = sand.u32 %s39, 1
          %s390 = scalar_lea.sflag [#allocation3], %s389
          %s391 = sand.u32 %s39, 1
          %s392 = smul.addr %s391, 32
          %s393 = scalar_lea.vmem [#allocation2], %s392
          %s394 = smul.u32 4, %s29
          %396 = vsyncadd %s390, 0
          %s397 = smul.addr %s394, 8
          %s398 = scalar_lea.hbm %s0, %s397
          %s399 = sshll.u32 %s398, 4
          %s400 = int_to_ptr.hbm [resolvable:$true] %s399
          %s401 = sshll.u32 %s393, 4
          %s402 = int_to_ptr.vmem [resolvable:$true] %s401
          %407 = dma.hbm_to_vmem [thread:$0]  %s400, 512, %s402, %s390, 128, 128, 8
        $region52: #{tpu_custom_call.1} parent=47 // pred_fallthru
          _
      $region48: #{tpu_custom_call.1} parent=5 // pred_fallthru
        _
      %p408 = scmp.le.s32.totalorder 1, %s29
      %p409 = scmp.lt.s32.totalorder %s29, 3
      %p410 = pnand %p408, %p409
      %p411 = pneg %p410
      // Predicated region
      $region53: #{tpu_custom_call.1} parent=5 // pred_check
        _
      $region54: #{tpu_custom_call.1} parent=5 // pred_check_branch
        %413 = sbr.rel (%p410) target = $region56
      $region55: #{tpu_custom_call.1} parent=5 // pred_region
        %s414 = ssub.s32 %s29, 1
        %s415 = sand.u32 %s42, 1
        %s416 = scalar_lea.sflag [#allocation3], %s415
        %s417 = sand.u32 %s42, 1
        %s418 = smul.addr %s417, 32
        %s419 = scalar_lea.vmem [#allocation2], %s418
        // Predicated region
        $region57: #{tpu_custom_call.1} parent=55 // pred_check
          %p420 = pneg %p55
        $region58: #{tpu_custom_call.1} parent=55 // pred_check_branch
          %422 = sbr.rel (%p420) target = $region60
        $region59: #{tpu_custom_call.1} parent=55 // pred_region
          %424 = dma.done %s416, 512
        $region60: #{tpu_custom_call.1} parent=55 // pred_fallthru
          _
        // Predicated region
        $region61: #{tpu_custom_call.1} parent=55 // pred_check
          %p425 = pneg %p76
        $region62: #{tpu_custom_call.1} parent=55 // pred_check_branch
          %427 = sbr.rel (%p425) target = $region64
        $region63: #{tpu_custom_call.1} parent=55 // pred_region
          %429 = dma.done [#allocation6], 16
        $region64: #{tpu_custom_call.1} parent=55 // pred_fallthru
          _
        // Predicated region
        $region65: #{tpu_custom_call.1} parent=55 // pred_check
          %p430 = pneg %p118
        $region66: #{tpu_custom_call.1} parent=55 // pred_check_branch
          %432 = sbr.rel (%p430) target = $region68
        $region67: #{tpu_custom_call.1} parent=55 // pred_region
          %434 = dma.done [#allocation6], 1024
        $region68: #{tpu_custom_call.1} parent=55 // pred_fallthru
          _
        // Predicated region
        $region69: #{tpu_custom_call.1} parent=55 // pred_check
          %p435 = pneg %p160
        $region70: #{tpu_custom_call.1} parent=55 // pred_check_branch
          %437 = sbr.rel (%p435) target = $region72
        $region71: #{tpu_custom_call.1} parent=55 // pred_region
          %439 = dma.done [#allocation9], 1024
        $region72: #{tpu_custom_call.1} parent=55 // pred_fallthru
          _
        // Predicated region
        $region73: #{tpu_custom_call.1} parent=55 // pred_check
          %p440 = pneg %p202
        $region74: #{tpu_custom_call.1} parent=55 // pred_check_branch
          %442 = sbr.rel (%p440) target = $region76
        $region75: #{tpu_custom_call.1} parent=55 // pred_region
          %444 = dma.done [#allocation9], 1024
        $region76: #{tpu_custom_call.1} parent=55 // pred_fallthru
          _
        %s445 = sand.u32 %s42, 1
        %s446 = scalar_lea.sflag [#allocation3], %s445
        %s447 = sand.u32 %s42, 1
        %s448 = smul.addr %s447, 32
        %s449 = scalar_lea.vmem [#allocation2], %s448
        %p450 = pneg %p55
        %p451 = pneg %p52
        %p452 = pneg %p76
        %p453 = pneg %p73
        %p454 = pneg %p97
        %p455 = pneg %p94
        %p456 = pneg %p118
        %p457 = pneg %p115
        %p458 = pneg %p139
        %p459 = pneg %p136
        %p460 = pneg %p160
        %p461 = pneg %p157
        %p462 = pneg %p181
        %p463 = pneg %p178
        %p464 = pneg %p202
        %p465 = pneg %p199
        %p466 = pneg %p223
        %p467 = pneg %p220
        %p468 = pneg %p249
        %p469 = pneg %p246
        %s470 = sand.u32 %s236, 1
        %s471 = scalar_lea.sflag [#allocation4], %s470
        %s472 = sand.u32 %s236, 1
        %s473 = smul.addr %s472, 16
        %s474 = scalar_lea.vmem [#allocation11], %s473
        %p475 = pneg %p275
        %p476 = pneg %p272
        %s477 = sand.u32 %s34, 1
        %s478 = scalar_lea.sflag [#allocation13], %s477
        %s479 = sand.u32 %s262, 1
        %s480 = smul.addr %s479, 16
        %s481 = scalar_lea.vmem [#allocation12], %s480
        %p482 = pneg %p301
        %p483 = pneg %p298
        %s484 = sand.u32 %s34, 1
        %s485 = scalar_lea.sflag [#allocation13], %s484
        %s486 = sand.u32 %s288, 1
        %s487 = smul.addr %s486, 16
        %s488 = scalar_lea.vmem [#allocation14], %s487
        %s489 = smul.u32 4, %s34
        %s490 = smul.u32 4, %s34
        %s491 = smul.u32 4, %s34
        %s492 = smul.u32 4, %s34
        %v493 = vld [vmem:[%s419] sm:$0xff]
        %v494 = vld [vmem:[%s419 + $0x8] sm:$0xff]
        %v495 = vld [vmem:[%s419 + $0x10] sm:$0xff]
        %v496 = vld [vmem:[%s419 + $0x18] sm:$0xff]
        %497 = vadd.xlane.f32.xlu0 %v493
        %v498 = vpop.xlane.xlu0 %497
        %499 = vadd.xlane.f32.xlu0 %v494
        %v500 = vpop.xlane.xlu0 %499
        %501 = vadd.xlane.f32.xlu0 %v495
        %v502 = vpop.xlane.xlu0 %501
        %503 = vadd.xlane.f32.xlu0 %v496
        %v504 = vpop.xlane.xlu0 %503
        %v505 = vrcp.pop 128.0
        %v506 = vmul.f32 128.0, %v505
        %v507 = vsub.f32 1.0, %v506
        %v508 = vmul.f32 %v505, %v507
        %v509 = vadd.f32 %v505, %v508
        %vm510 = vweird.f32 %v505
        %v511 = vsel %vm510, %v505, %v509
        %v512 = vmul.f32 %v498, %v511
        %v513 = vmul.f32 %v500, %v511
        %v514 = vmul.f32 %v502, %v511
        %v515 = vmul.f32 %v504, %v511
        %v516 = vsub.f32 %v493, %v512
        %v517 = vsub.f32 %v494, %v513
        %v518 = vsub.f32 %v495, %v514
        %v519 = vsub.f32 %v496, %v515
        %v520 = vmul.f32 %v516, %v516
        %v521 = vmul.f32 %v517, %v517
        %v522 = vmul.f32 %v518, %v518
        %v523 = vmul.f32 %v519, %v519
        %524 = vadd.xlane.f32.xlu0 %v520
        %v525 = vpop.xlane.xlu0 %524
        %526 = vadd.xlane.f32.xlu0 %v521
        %v527 = vpop.xlane.xlu0 %526
        %528 = vadd.xlane.f32.xlu0 %v522
        %v529 = vpop.xlane.xlu0 %528
        %530 = vadd.xlane.f32.xlu0 %v523
        %v531 = vpop.xlane.xlu0 %530
        %v532 = vmul.f32 %v525, %v511
        %v533 = vmul.f32 %v527, %v511
        %v534 = vmul.f32 %v529, %v511
        %v535 = vmul.f32 %v531, %v511
        %v536 = vadd.f32 %v532, 1e-05
        %v537 = vadd.f32 %v533, 1e-05
        %v538 = vadd.f32 %v534, 1e-05
        %v539 = vadd.f32 %v535, 1e-05
        %v540 = vrsqrt.pop %v536
        %v541 = vmul.f32 %v540, %v536
        %v542 = vmul.f32 %v541, %v540
        %v543 = vmul.f32 0.5, %v542
        %v544 = vsub.f32 1.5, %v543
        %v545 = vmul.f32 %v540, %v544
        %vm546 = vweird.f32 %v536
        %vm547 = vweird.f32 %v540
        %vm548 = vmor %vm546, %vm547
        %v549 = vsel %vm548, %v540, %v545
        %v550 = vrsqrt.pop %v537
        %v551 = vmul.f32 %v550, %v537
        %v552 = vmul.f32 %v551, %v550
        %v553 = vmul.f32 0.5, %v552
        %v554 = vsub.f32 1.5, %v553
        %v555 = vmul.f32 %v550, %v554
        %vm556 = vweird.f32 %v537
        %vm557 = vweird.f32 %v550
        %vm558 = vmor %vm556, %vm557
        %v559 = vsel %vm558, %v550, %v555
        %v560 = vrsqrt.pop %v538
        %v561 = vmul.f32 %v560, %v538
        %v562 = vmul.f32 %v561, %v560
        %v563 = vmul.f32 0.5, %v562
        %v564 = vsub.f32 1.5, %v563
        %v565 = vmul.f32 %v560, %v564
        %vm566 = vweird.f32 %v538
        %vm567 = vweird.f32 %v560
        %vm568 = vmor %vm566, %vm567
        %v569 = vsel %vm568, %v560, %v565
        %v570 = vrsqrt.pop %v539
        %v571 = vmul.f32 %v570, %v539
        %v572 = vmul.f32 %v571, %v570
        %v573 = vmul.f32 0.5, %v572
        %v574 = vsub.f32 1.5, %v573
        %v575 = vmul.f32 %v570, %v574
        %vm576 = vweird.f32 %v539
        %vm577 = vweird.f32 %v570
        %vm578 = vmor %vm576, %vm577
        %v579 = vsel %vm578, %v570, %v575
        %v580 = vmul.f32 %v516, %v549
        %v581 = vmul.f32 %v517, %v559
        %v582 = vmul.f32 %v518, %v569
        %v583 = vmul.f32 %v519, %v579
        %v584 = vld [vmem:[#allocation5] sm:$0x1]
        %v586 = vperm.slane %v584, 0
        %v588 = vmul.f32 %v580, %v586
        %v589 = vmul.f32 %v581, %v586
        %v590 = vmul.f32 %v582, %v586
        %v591 = vmul.f32 %v583, %v586
        %v592 = vld [vmem:[%s2] sm:$0x1]
        %v594 = vperm.slane %v592, 0
        %v596 = vadd.f32 %v588, %v594
        %v597 = vadd.f32 %v589, %v594
        %v598 = vadd.f32 %v590, %v594
        %v599 = vadd.f32 %v591, %v594
        %v600 = vpack.c.bf16 %v597, %v596
        %v601 = vpack.c.bf16 %v599, %v598
        %v602 = vld [vmem:[#allocation7] sm:$0xf]
        %v603 = vld [vmem:[#allocation7 + $0x4] sm:$0xf]
        %v604 = vld [vmem:[#allocation7 + $0x8] sm:$0xf]
        %v605 = vld [vmem:[#allocation7 + $0xc] sm:$0xf]
        %v606 = vld [vmem:[#allocation7 + $0x10] sm:$0xf]
        %v607 = vld [vmem:[#allocation7 + $0x14] sm:$0xf]
        %v608 = vld [vmem:[#allocation7 + $0x18] sm:$0xf]
        %v609 = vld [vmem:[#allocation7 + $0x1c] sm:$0xf]
        %v610 = vld [vmem:[#allocation7 + $0x20] sm:$0xf]
        %v611 = vld [vmem:[#allocation7 + $0x24] sm:$0xf]
        %v612 = vld [vmem:[#allocation7 + $0x28] sm:$0xf]
        %v613 = vld [vmem:[#allocation7 + $0x2c] sm:$0xf]
        %v614 = vld [vmem:[#allocation7 + $0x30] sm:$0xf]
        %v615 = vld [vmem:[#allocation7 + $0x34] sm:$0xf]
        %v616 = vld [vmem:[#allocation7 + $0x38] sm:$0xf]
        %v617 = vld [vmem:[#allocation7 + $0x3c] sm:$0xf]
        %v618 = vld [vmem:[%s4] sm:$0x1]
        %v620 = vperm.slane %v618, 0
        %v638 = vunpack.c.l.b16 %v602
        %v639 = vunpack.c.l.b16 %v603
        %v640 = vunpack.c.l.b16 %v604
        %v641 = vunpack.c.l.b16 %v605
        %v642 = vunpack.c.l.b16 %v606
        %v643 = vunpack.c.l.b16 %v607
        %v644 = vunpack.c.l.b16 %v608
        %v645 = vunpack.c.l.b16 %v609
        %v646 = vunpack.c.l.b16 %v610
        %v647 = vunpack.c.l.b16 %v611
        %v648 = vunpack.c.l.b16 %v612
        %v649 = vunpack.c.l.b16 %v613
        %v650 = vunpack.c.l.b16 %v614
        %v651 = vunpack.c.l.b16 %v615
        %v652 = vunpack.c.l.b16 %v616
        %v653 = vunpack.c.l.b16 %v617
        %v654 = vpack.c.b16 %v639, %v638
        %v655 = vpack.c.b16 %v641, %v640
        %v656 = vpack.c.b16 %v643, %v642
        %v657 = vpack.c.b16 %v645, %v644
        %v658 = vpack.c.b16 %v647, %v646
        %v659 = vpack.c.b16 %v649, %v648
        %v660 = vpack.c.b16 %v651, %v650
        %v661 = vpack.c.b16 %v653, %v652
        %670 = vmatpush.bf16.msra.mxu0 %v661
        %671 = vmatpush.bf16.msra.mxu0 %v660
        %672 = vmatpush.bf16.msra.mxu0 %v659
        %673 = vmatpush.bf16.msra.mxu0 %v658
        %674 = vmatpush.bf16.msra.mxu0 %v657
        %675 = vmatpush.bf16.msra.mxu0 %v656
        %676 = vmatpush.bf16.msra.mxu0 %v655
        %677 = vmatpush.bf16.msra.mxu0 %v654
        %678 = vmatmul.bf16.gmra.mxu0 %v600
        %v679 = vpop.f32.mrf.mxu0
        %v680 = vadd.f32 %v620, %v679
        %v681 = vpop.f32.mrf.mxu0
        %v682 = vadd.f32 %v620, %v681
        %683 = vmatmul.bf16.gmra.mxu0 %v601
        %v684 = vpop.f32.mrf.mxu0
        %v685 = vadd.f32 %v620, %v684
        %v686 = vpop.f32.mrf.mxu0
        %v687 = vadd.f32 %v620, %v686
        %688 = vdwg.mxu0
        %v689 = vpack.c.bf16 %v680, %v680
        %v690 = vpack.c.bf16 %v682, %v682
        %v691 = vpack.c.bf16 %v685, %v685
        %v692 = vpack.c.bf16 %v687, %v687
        %693 = vst [vmem:[%s474] sm:$0xf] %v689
        %694 = vst [vmem:[%s474 + $0x4] sm:$0xf] %v690
        %695 = vst [vmem:[%s474 + $0x8] sm:$0xf] %v691
        %696 = vst [vmem:[%s474 + $0xc] sm:$0xf] %v692
        %v697 = vld [vmem:[#allocation8] sm:$0xf]
        %v698 = vld [vmem:[#allocation8 + $0x4] sm:$0xf]
        %v699 = vld [vmem:[#allocation8 + $0x8] sm:$0xf]
        %v700 = vld [vmem:[#allocation8 + $0xc] sm:$0xf]
        %v701 = vld [vmem:[#allocation8 + $0x10] sm:$0xf]
        %v702 = vld [vmem:[#allocation8 + $0x14] sm:$0xf]
        %v703 = vld [vmem:[#allocation8 + $0x18] sm:$0xf]
        %v704 = vld [vmem:[#allocation8 + $0x1c] sm:$0xf]
        %v705 = vld [vmem:[#allocation8 + $0x20] sm:$0xf]
        %v706 = vld [vmem:[#allocation8 + $0x24] sm:$0xf]
        %v707 = vld [vmem:[#allocation8 + $0x28] sm:$0xf]
        %v708 = vld [vmem:[#allocation8 + $0x2c] sm:$0xf]
        %v709 = vld [vmem:[#allocation8 + $0x30] sm:$0xf]
        %v710 = vld [vmem:[#allocation8 + $0x34] sm:$0xf]
        %v711 = vld [vmem:[#allocation8 + $0x38] sm:$0xf]
        %v712 = vld [vmem:[#allocation8 + $0x3c] sm:$0xf]
        %v713 = vld [vmem:[%s6] sm:$0x1]
        %v715 = vperm.slane %v713, 0
        %v733 = vunpack.c.l.b16 %v697
        %v734 = vunpack.c.l.b16 %v698
        %v735 = vunpack.c.l.b16 %v699
        %v736 = vunpack.c.l.b16 %v700
        %v737 = vunpack.c.l.b16 %v701
        %v738 = vunpack.c.l.b16 %v702
        %v739 = vunpack.c.l.b16 %v703
        %v740 = vunpack.c.l.b16 %v704
        %v741 = vunpack.c.l.b16 %v705
        %v742 = vunpack.c.l.b16 %v706
        %v743 = vunpack.c.l.b16 %v707
        %v744 = vunpack.c.l.b16 %v708
        %v745 = vunpack.c.l.b16 %v709
        %v746 = vunpack.c.l.b16 %v710
        %v747 = vunpack.c.l.b16 %v711
        %v748 = vunpack.c.l.b16 %v712
        %v749 = vpack.c.b16 %v734, %v733
        %v750 = vpack.c.b16 %v736, %v735
        %v751 = vpack.c.b16 %v738, %v737
        %v752 = vpack.c.b16 %v740, %v739
        %v753 = vpack.c.b16 %v742, %v741
        %v754 = vpack.c.b16 %v744, %v743
        %v755 = vpack.c.b16 %v746, %v745
        %v756 = vpack.c.b16 %v748, %v747
        %765 = vmatpush.bf16.msra.mxu0 %v756
        %766 = vmatpush.bf16.msra.mxu0 %v755
        %767 = vmatpush.bf16.msra.mxu0 %v754
        %768 = vmatpush.bf16.msra.mxu0 %v753
        %769 = vmatpush.bf16.msra.mxu0 %v752
        %770 = vmatpush.bf16.msra.mxu0 %v751
        %771 = vmatpush.bf16.msra.mxu0 %v750
        %772 = vmatpush.bf16.msra.mxu0 %v749
        %773 = vmatmul.bf16.gmra.mxu0 %v600
        %v774 = vpop.f32.mrf.mxu0
        %v775 = vadd.f32 %v715, %v774
        %v776 = vpop.f32.mrf.mxu0
        %v777 = vadd.f32 %v715, %v776
        %778 = vmatmul.bf16.gmra.mxu0 %v601
        %v779 = vpop.f32.mrf.mxu0
        %v780 = vadd.f32 %v715, %v779
        %v781 = vpop.f32.mrf.mxu0
        %v782 = vadd.f32 %v715, %v781
        %783 = vdwg.mxu0
        %v784 = vpack.c.bf16 %v775, %v775
        %v785 = vpack.c.bf16 %v777, %v777
        %v786 = vpack.c.bf16 %v780, %v780
        %v787 = vpack.c.bf16 %v782, %v782
        %788 = vst [vmem:[%s481] sm:$0xf] %v784
        %789 = vst [vmem:[%s481 + $0x4] sm:$0xf] %v785
        %790 = vst [vmem:[%s481 + $0x8] sm:$0xf] %v786
        %791 = vst [vmem:[%s481 + $0xc] sm:$0xf] %v787
        %v792 = vld [vmem:[#allocation10] sm:$0xf]
        %v793 = vld [vmem:[#allocation10 + $0x4] sm:$0xf]
        %v794 = vld [vmem:[#allocation10 + $0x8] sm:$0xf]
        %v795 = vld [vmem:[#allocation10 + $0xc] sm:$0xf]
        %v796 = vld [vmem:[#allocation10 + $0x10] sm:$0xf]
        %v797 = vld [vmem:[#allocation10 + $0x14] sm:$0xf]
        %v798 = vld [vmem:[#allocation10 + $0x18] sm:$0xf]
        %v799 = vld [vmem:[#allocation10 + $0x1c] sm:$0xf]
        %v800 = vld [vmem:[#allocation10 + $0x20] sm:$0xf]
        %v801 = vld [vmem:[#allocation10 + $0x24] sm:$0xf]
        %v802 = vld [vmem:[#allocation10 + $0x28] sm:$0xf]
        %v803 = vld [vmem:[#allocation10 + $0x2c] sm:$0xf]
        %v804 = vld [vmem:[#allocation10 + $0x30] sm:$0xf]
        %v805 = vld [vmem:[#allocation10 + $0x34] sm:$0xf]
        %v806 = vld [vmem:[#allocation10 + $0x38] sm:$0xf]
        %v807 = vld [vmem:[#allocation10 + $0x3c] sm:$0xf]
        %v808 = vld [vmem:[%s8] sm:$0x1]
        %v810 = vperm.slane %v808, 0
        %v828 = vunpack.c.l.b16 %v792
        %v829 = vunpack.c.l.b16 %v793
        %v830 = vunpack.c.l.b16 %v794
        %v831 = vunpack.c.l.b16 %v795
        %v832 = vunpack.c.l.b16 %v796
        %v833 = vunpack.c.l.b16 %v797
        %v834 = vunpack.c.l.b16 %v798
        %v835 = vunpack.c.l.b16 %v799
        %v836 = vunpack.c.l.b16 %v800
        %v837 = vunpack.c.l.b16 %v801
        %v838 = vunpack.c.l.b16 %v802
        %v839 = vunpack.c.l.b16 %v803
        %v840 = vunpack.c.l.b16 %v804
        %v841 = vunpack.c.l.b16 %v805
        %v842 = vunpack.c.l.b16 %v806
        %v843 = vunpack.c.l.b16 %v807
        %v844 = vpack.c.b16 %v829, %v828
        %v845 = vpack.c.b16 %v831, %v830
        %v846 = vpack.c.b16 %v833, %v832
        %v847 = vpack.c.b16 %v835, %v834
        %v848 = vpack.c.b16 %v837, %v836
        %v849 = vpack.c.b16 %v839, %v838
        %v850 = vpack.c.b16 %v841, %v840
        %v851 = vpack.c.b16 %v843, %v842
        %860 = vmatpush.bf16.msra.mxu0 %v851
        %861 = vmatpush.bf16.msra.mxu0 %v850
        %862 = vmatpush.bf16.msra.mxu0 %v849
        %863 = vmatpush.bf16.msra.mxu0 %v848
        %864 = vmatpush.bf16.msra.mxu0 %v847
        %865 = vmatpush.bf16.msra.mxu0 %v846
        %866 = vmatpush.bf16.msra.mxu0 %v845
        %867 = vmatpush.bf16.msra.mxu0 %v844
        %868 = vmatmul.bf16.gmra.mxu0 %v600
        %v869 = vpop.f32.mrf.mxu0
        %v870 = vadd.f32 %v810, %v869
        %v871 = vpop.f32.mrf.mxu0
        %v872 = vadd.f32 %v810, %v871
        %873 = vmatmul.bf16.gmra.mxu0 %v601
        %v874 = vpop.f32.mrf.mxu0
        %v875 = vadd.f32 %v810, %v874
        %v876 = vpop.f32.mrf.mxu0
        %v877 = vadd.f32 %v810, %v876
        %878 = vdwg.mxu0
        %v879 = vpack.c.bf16 %v870, %v870
        %v880 = vpack.c.bf16 %v872, %v872
        %v881 = vpack.c.bf16 %v875, %v875
        %v882 = vpack.c.bf16 %v877, %v877
        %883 = vst [vmem:[%s488] sm:$0xf] %v879
        %884 = vst [vmem:[%s488 + $0x4] sm:$0xf] %v880
        %885 = vst [vmem:[%s488 + $0x8] sm:$0xf] %v881
        %886 = vst [vmem:[%s488 + $0xc] sm:$0xf] %v882
        %s887 = sand.u32 %s236, 1
        %s888 = scalar_lea.sflag [#allocation4], %s887
        %s889 = sand.u32 %s236, 1
        %s890 = smul.addr %s889, 16
        %s891 = scalar_lea.vmem [#allocation11], %s890
        %s892 = sand.u32 %s34, 1
        %s893 = scalar_lea.sflag [#allocation13], %s892
        %s894 = sand.u32 %s262, 1
        %s895 = smul.addr %s894, 16
        %s896 = scalar_lea.vmem [#allocation12], %s895
        %s897 = sand.u32 %s34, 1
        %s898 = scalar_lea.sflag [#allocation13], %s897
        %s899 = sand.u32 %s288, 1
        %s900 = smul.addr %s899, 16
        %s901 = scalar_lea.vmem [#allocation14], %s900
        // Predicated region
        $region77: #{tpu_custom_call.1} parent=55 // pred_check
          %p902 = pneg %p246
        $region78: #{tpu_custom_call.1} parent=55 // pred_check_branch
          %904 = sbr.rel (%p902) target = $region80
        $region79: #{tpu_custom_call.1} parent=55 // pred_region
          %s905 = smul.u32 4, %s34
          %907 = vsyncadd %s888, 0
          %s908 = smul.addr %s905, 4
          %s909 = scalar_lea.hbm %s9, %s908
          %s910 = sshll.u32 %s891, 4
          %s911 = int_to_ptr.vmem [resolvable:$true] %s910
          %s912 = sshll.u32 %s909, 4
          %s913 = int_to_ptr.hbm [resolvable:$true] %s912
          %918 = dma.vmem_to_hbm [thread:$0]  %s911, 256, %s913, %s888, 64, 64, 4
        $region80: #{tpu_custom_call.1} parent=55 // pred_fallthru
          _
        // Predicated region
        $region81: #{tpu_custom_call.1} parent=55 // pred_check
          %p919 = pneg %p272
        $region82: #{tpu_custom_call.1} parent=55 // pred_check_branch
          %921 = sbr.rel (%p919) target = $region84
        $region83: #{tpu_custom_call.1} parent=55 // pred_region
          %s922 = smul.u32 4, %s34
          %924 = vsyncadd %s893, 0
          %s925 = smul.addr %s922, 4
          %s926 = scalar_lea.hbm %s10, %s925
          %s927 = sshll.u32 %s896, 4
          %s928 = int_to_ptr.vmem [resolvable:$true] %s927
          %s929 = sshll.u32 %s926, 4
          %s930 = int_to_ptr.hbm [resolvable:$true] %s929
          %935 = dma.vmem_to_hbm [thread:$0]  %s928, 256, %s930, %s893, 64, 64, 4
        $region84: #{tpu_custom_call.1} parent=55 // pred_fallthru
          _
        // Predicated region
        $region85: #{tpu_custom_call.1} parent=55 // pred_check
          %p936 = pneg %p298
        $region86: #{tpu_custom_call.1} parent=55 // pred_check_branch
          %938 = sbr.rel (%p936) target = $region88
        $region87: #{tpu_custom_call.1} parent=55 // pred_region
          %s939 = smul.u32 4, %s34
          %941 = vsyncadd %s898, 0
          %s942 = smul.addr %s939, 4
          %s943 = scalar_lea.hbm %s11, %s942
          %s944 = sshll.u32 %s901, 4
          %s945 = int_to_ptr.vmem [resolvable:$true] %s944
          %s946 = sshll.u32 %s943, 4
          %s947 = int_to_ptr.hbm [resolvable:$true] %s946
          %952 = dma.vmem_to_hbm [thread:$0]  %s945, 256, %s947, %s898, 64, 64, 4
        $region88: #{tpu_custom_call.1} parent=55 // pred_fallthru
          _
      $region56: #{tpu_custom_call.1} parent=5 // pred_fallthru
        _
      %p953 = scmp.le.s32.totalorder 2, %s29
      // Predicated region
      $region89: #{tpu_custom_call.1} parent=5 // pred_check
        %p954 = pneg %p953
      $region90: #{tpu_custom_call.1} parent=5 // pred_check_branch
        %956 = sbr.rel (%p954) target = $region92
      $region91: #{tpu_custom_call.1} parent=5 // pred_region
        %s957 = ssub.s32 %s29, 2
        // Predicated region
        $region93: #{tpu_custom_call.1} parent=91 // pred_check
          %p958 = pneg %p252
        $region94: #{tpu_custom_call.1} parent=91 // pred_check_branch
          %960 = sbr.rel (%p958) target = $region96
        $region95: #{tpu_custom_call.1} parent=91 // pred_region
          %s961 = sand.u32 %s237, 1
          %s962 = scalar_lea.sflag [#allocation4], %s961
          %s963 = sand.u32 %s237, 1
          %s964 = smul.addr %s963, 16
          %s965 = scalar_lea.vmem [#allocation11], %s964
          %967 = dma.done %s962, 256
        $region96: #{tpu_custom_call.1} parent=91 // pred_fallthru
          _
        // Predicated region
        $region97: #{tpu_custom_call.1} parent=91 // pred_check
          %p968 = pneg %p278
        $region98: #{tpu_custom_call.1} parent=91 // pred_check_branch
          %970 = sbr.rel (%p968) target = $region100
        $region99: #{tpu_custom_call.1} parent=91 // pred_region
          %s971 = sand.u32 %s35, 1
          %s972 = scalar_lea.sflag [#allocation13], %s971
          %s973 = sand.u32 %s263, 1
          %s974 = smul.addr %s973, 16
          %s975 = scalar_lea.vmem [#allocation12], %s974
          %977 = dma.done %s972, 256
        $region100: #{tpu_custom_call.1} parent=91 // pred_fallthru
          _
        // Predicated region
        $region101: #{tpu_custom_call.1} parent=91 // pred_check
          %p978 = pneg %p304
        $region102: #{tpu_custom_call.1} parent=91 // pred_check_branch
          %980 = sbr.rel (%p978) target = $region104
        $region103: #{tpu_custom_call.1} parent=91 // pred_region
          %s981 = sand.u32 %s35, 1
          %s982 = scalar_lea.sflag [#allocation13], %s981
          %s983 = sand.u32 %s289, 1
          %s984 = smul.addr %s983, 16
          %s985 = scalar_lea.vmem [#allocation14], %s984
          %987 = dma.done %s982, 256
        $region104: #{tpu_custom_call.1} parent=91 // pred_fallthru
          _
      $region92: #{tpu_custom_call.1} parent=5 // pred_fallthru
        _
    $region6: #{tpu_custom_call.1} parent=1 // loop_footer
      %s33 = sadd.s32 1, %s29
    $region7: #{tpu_custom_call.1} parent=1 // loop_footer_branch
      %28 = sbr.rel target = $region3
    $region8: #{tpu_custom_call.1} parent=1 // loop_exit
      _
    %988 = vsyncpa [#allocation3], 1
    %s989 = scalar_lea.sflag [#allocation3], 1
    %990 = vsyncpa %s989, 1
    %991 = vsyncpa [#allocation6], 1
    %992 = vsyncpa [#allocation9], 1
    %993 = vsyncpa [#allocation4], 1
    %s994 = scalar_lea.sflag [#allocation4], 1
    %995 = vsyncpa %s994, 1
    %996 = vsyncpa [#allocation13], 1
    %s997 = scalar_lea.sflag [#allocation13], 1
    %998 = vsyncpa %s997, 1

</llo_original>
